<compile_context>
chip_gen: v7x
topology: tpu7x:2x2x1
jax: 0.10.0
libtpu: 0.0.40
codegen_flags: <defaults>
</compile_context>

<pallas_src>
import jax
import jax.numpy as jnp
from jax.experimental import pallas as pl
from jax.experimental.pallas import tpu as pltpu


def _round_up(x, m):
    return (x + m - 1) // m * m


def _sigmoid(x):
    # sigma(x) = 0.5 * tanh(0.5 x) + 0.5  -- single EUP transcendental, no divide.
    return 0.5 * jnp.tanh(0.5 * x) + 0.5


def _elu(x):
    # ELU(alpha=1.0); exp arg clamped so the discarded branch never overflows.
    return jnp.where(x > 0, x, jnp.exp(jnp.minimum(x, 0.0)) - 1.0)


def _make_kernel(Tc, H, gate_dtype):
    """Kernel for one (batch_tile, time_chunk) grid point: Tc fused LSTM+MLP steps."""

    def kernel(obs_ref, h0_ref, c0_ref,
               wih_ref, whh_ref, bg_ref,
               w1_ref, b1_ref, w2_ref, b2_ref,
               lat_ref, hout_ref, cout_ref,
               h_sc, c_sc):
        tc = pl.program_id(1)

        @pl.when(tc == 0)
        def _init():
            h_sc[...] = h0_ref[...].astype(jnp.float32)
            c_sc[...] = c0_ref[...].astype(jnp.float32)

        @pl.loop(0, Tc)
        def _step(s):
            # In-kernel f32 -> bf16 cast of the observation row (cheap VPU op).
            x = obs_ref[s].astype(jnp.bfloat16)          # (bt, in_dim)
            h = h_sc[...]                                # (bt, H) f32
            c = c_sc[...]                                # (bt, H) f32

            # gates = x @ W_ih + h @ W_hh + (b_ih + b_hh)   -> (bt, 4H), f32 accum.
            gates = (jnp.dot(x, wih_ref[...], preferred_element_type=jnp.float32)
                     + jnp.dot(h.astype(jnp.bfloat16), whh_ref[...],
                               preferred_element_type=jnp.float32)
                     + bg_ref[...])

            # PyTorch LSTM gate order: i, f, g, o.  Nonlinearities in gate_dtype
            # (bf16 on v6e/v7x -> ~2x EUP throughput), cell math stays f32.
            g = gates.astype(gate_dtype)
            i_g = _sigmoid(g[:, 0 * H:1 * H]).astype(jnp.float32)
            f_g = _sigmoid(g[:, 1 * H:2 * H]).astype(jnp.float32)
            g_g = jnp.tanh(g[:, 2 * H:3 * H]).astype(jnp.float32)
            o_g = _sigmoid(g[:, 3 * H:4 * H]).astype(jnp.float32)

            c_new = f_g * c + i_g * g_g
            h_new = o_g * jnp.tanh(c_new.astype(gate_dtype)).astype(jnp.float32)

            h_sc[...] = h_new
            c_sc[...] = c_new

            # last_mlp: Linear(H,128) -> ELU -> Linear(128, out_pad), per step.
            z = jnp.dot(h_new.astype(jnp.bfloat16), w1_ref[...],
                        preferred_element_type=jnp.float32) + b1_ref[...]
            z = _elu(z)
            lat = jnp.dot(z.astype(jnp.bfloat16), w2_ref[...],
                          preferred_element_type=jnp.float32) + b2_ref[...]
            lat_ref[s] = lat.astype(lat_ref.dtype)       # lane-dense 128-wide bf16 store

        @pl.when(tc == pl.num_programs(1) - 1)
        def _finalize():
            # Valid because the time axis is the innermost grid axis and the h'/c'
            # output block index is constant along it: the final visit per batch tile
            # is tc == last, and writeback happens only when the block index changes.
            hout_ref[...] = h_sc[...].astype(hout_ref.dtype)
            cout_ref[...] = c_sc[...].astype(cout_ref.dtype)

    return kernel


def rnn_estimator_forward(obs, h0, c0, params, *, output_size,
                          batch_tile=256, time_chunk=16,
                          gate_dtype=jnp.bfloat16):
    """obs: [T, B, input_size] f32.  h0, c0: [num_layers=1, B, hidden] f32.

    Returns (latent [T, B, output_size] f32, h' [1, B, H] f32, c' [1, B, H] f32).
    On v5e prefer batch_tile=128 and gate_dtype=jnp.float32.
    """
    T, B, in_dim = obs.shape
    num_layers, _, H = h0.shape
    assert num_layers == 1  # TODO(synk): stacked (num_layers > 1) LSTM not implemented
    out_pad = params["w2"].shape[1]

    # Batch tile: multiple of 8 sublanes; keep >= 2 tiles when B >= 16 so the
    # "parallel" batch axis can shard across v7x's two TensorCores.
    bt = _round_up(min(batch_tile, _round_up(B, 8)), 8)
    if B >= 16:
        bt = min(bt, _round_up(-(-B // 2), 8))
    Bp = _round_up(B, bt)

    # Time chunk: largest divisor of T that is <= time_chunk (no time padding needed).
    Tc = max(1, min(time_chunk, T))
    while T % Tc:
        Tc -= 1

    h0s = h0[0].astype(jnp.float32)
    c0s = c0[0].astype(jnp.float32)
    obs_p = obs
    if Bp != B:  # ragged batch -> zero-pad rows (sliced back off); no-op otherwise
        obs_p = jnp.pad(obs_p, ((0, 0), (0, Bp - B), (0, 0)))
        h0s = jnp.pad(h0s, ((0, Bp - B), (0, 0)))
        c0s = jnp.pad(c0s, ((0, Bp - B), (0, 0)))

    grid = (Bp // bt, T // Tc)

    def const(shape):
        # Resident weights/biases: constant index_map, stay in VMEM for the whole grid.
        # TODO(synk): pipeline_mode=pl.Buffered(1) would drop the dead second buffer
        # (~1 MiB) on v7x; skipped for compile safety, far under the VMEM budget.
        return pl.BlockSpec(shape, lambda b, t: (0,) * len(shape))

    kernel = _make_kernel(Tc, H, gate_dtype)

    lat_p, h_out, c_out = pl.pallas_call(
        kernel,
        out_shape=(
            jax.ShapeDtypeStruct((T, Bp, out_pad), jnp.bfloat16),
            jax.ShapeDtypeStruct((Bp, H), jnp.float32),
            jax.ShapeDtypeStruct((Bp, H), jnp.float32),
        ),
        grid_spec=pltpu.PrefetchScalarGridSpec(
            num_scalar_prefetch=0,
            grid=grid,
            in_specs=[
                pl.BlockSpec((Tc, bt, in_dim), lambda b, t: (t, b, 0)),   # obs chunk
                pl.BlockSpec((bt, H), lambda b, t: (b, 0)),               # h0
                pl.BlockSpec((bt, H), lambda b, t: (b, 0)),               # c0
                const(params["wih"].shape),
                const(params["whh"].shape),
                const(params["bg"].shape),
                const(params["w1"].shape),
                const(params["b1"].shape),
                const(params["w2"].shape),
                const(params["b2"].shape),
            ],
            out_specs=[
                pl.BlockSpec((Tc, bt, out_pad), lambda b, t: (t, b, 0)),  # latent chunk
                pl.BlockSpec((bt, H), lambda b, t: (b, 0)),               # h'
                pl.BlockSpec((bt, H), lambda b, t: (b, 0)),               # c'
            ],
            scratch_shapes=[
                pltpu.VMEM((bt, H), jnp.float32),   # recurrent h (f32)
                pltpu.VMEM((bt, H), jnp.float32),   # recurrent c (f32)
            ],
        ),
        compiler_params=pltpu.CompilerParams(
            dimension_semantics=("parallel", "arbitrary")),
    )(obs_p, h0s, c0s,
      params["wih"], params["whh"], params["bg"],
      params["w1"], params["b1"], params["w2"], params["b2"])

    latent = lat_p[:, :B, :output_size].astype(jnp.float32)
    return latent, h_out[:B][None], c_out[:B][None]


def init_params(key, input_size, hidden_size, output_size):
    """Deterministic synthetic init, stored transposed ([in, out]).
    Matmul weights are bf16 (MXU dtype); biases stay f32 (added post-accumulation)."""
    H = hidden_size
    out_pad = _round_up(max(output_size, 1), 128)

    key, k0, k1, k2, k3, k4, k5, k6, k7 = jax.random.split(key, 9)

    def u(kk, shape, bound):
        return jax.random.uniform(kk, shape, jnp.float32, -bound, bound)

    kr = 1.0 / (H ** 0.5)
    wih = u(k0, (input_size, 4 * H), kr)
    whh = u(k1, (H, 4 * H), kr)
    bg = u(k2, (1, 4 * H), kr) + u(k3, (1, 4 * H), kr)          # b_ih + b_hh

    w1 = u(k4, (H, 128), kr)
    b1 = u(k5, (1, 128), kr)
    k2b = 1.0 / (128.0 ** 0.5)
    w2 = jnp.zeros((128, out_pad), jnp.float32).at[:, :output_size].set(
        u(k6, (128, output_size), k2b))
    b2 = jnp.zeros((1, out_pad), jnp.float32).at[:, :output_size].set(
        u(k7, (1, output_size), k2b))

    return {
        "wih": wih.astype(jnp.bfloat16),
        "whh": whh.astype(jnp.bfloat16),
        "bg": bg,
        "w1": w1.astype(jnp.bfloat16),
        "b1": b1,
        "w2": w2.astype(jnp.bfloat16),
        "b2": b2,
    }


def reference_forward(obs, h0, c0, params, output_size, gate_dtype=jnp.bfloat16):
    """Pure-JAX reference mirroring the kernel's precision choices."""
    T, B, _ = obs.shape
    x = obs.astype(jnp.bfloat16)
    h = h0[0].astype(jnp.float32)
    c = c0[0].astype(jnp.float32)
    H = h.shape[-1]
    wih, whh, bg = params["wih"], params["whh"], params["bg"]
    w1, b1, w2, b2 = params["w1"], params["b1"], params["w2"], params["b2"]

    lats = []
    for t in range(T):
        gates = (jnp.dot(x[t], wih, preferred_element_type=jnp.float32)
                 + jnp.dot(h.astype(jnp.bfloat16), whh,
                           preferred_element_type=jnp.float32)
                 + bg)
        g = gates.astype(gate_dtype)
        i_g = _sigmoid(g[:, 0 * H:1 * H]).astype(jnp.float32)
        f_g = _sigmoid(g[:, 1 * H:2 * H]).astype(jnp.float32)
        g_g = jnp.tanh(g[:, 2 * H:3 * H]).astype(jnp.float32)
        o_g = _sigmoid(g[:, 3 * H:4 * H]).astype(jnp.float32)
        c = f_g * c + i_g * g_g
        h = o_g * jnp.tanh(c.astype(gate_dtype)).astype(jnp.float32)
        z = jnp.dot(h.astype(jnp.bfloat16), w1,
                    preferred_element_type=jnp.float32) + b1
        z = _elu(z)
        lat = jnp.dot(z.astype(jnp.bfloat16), w2,
                      preferred_element_type=jnp.float32) + b2
        lats.append(lat.astype(jnp.bfloat16).astype(jnp.float32)[:, :output_size])
    return jnp.stack(lats, 0), h[None], c[None]


if __name__ == "__main__":
    # Small shapes consistent with RNNEstimator(input_size, output_size,
    # activation=ELU(), type='lstm', num_layers=1, hidden_size=256).
    input_size = 48
    hidden_size = 256       # module default
    output_size = 16
    seq_len = 8
    batch = 8

    key = jax.random.PRNGKey(0)
    key, ko, kh, kc = jax.random.split(key, 4)
    obs = jax.random.normal(ko, (seq_len, batch, input_size), jnp.float32)
    h0 = 0.1 * jax.random.normal(kh, (1, batch, hidden_size), jnp.float32)
    c0 = 0.1 * jax.random.normal(kc, (1, batch, hidden_size), jnp.float32)
    params = init_params(key, input_size, hidden_size, output_size)

    latent, h_out, c_out = rnn_estimator_forward(
        obs, h0, c0, params, output_size=output_size)
    latent, h_out, c_out = jax.block_until_ready((latent, h_out, c_out))

    lat_ref, h_ref, c_ref = reference_forward(obs, h0, c0, params, output_size)

    assert latent.shape == (seq_len, batch, output_size)
    assert h_out.shape == (1, batch, hidden_size)
    assert c_out.shape == (1, batch, hidden_size)
    assert jnp.allclose(latent, lat_ref, atol=2e-2, rtol=2e-2), "latent mismatch"
    assert jnp.allclose(h_out, h_ref, atol=2e-2, rtol=2e-2), "h mismatch"
    assert jnp.allclose(c_out, c_ref, atol=2e-2, rtol=2e-2), "c mismatch"

    print("KERNEL_OK")
</pallas_src>

<mosaic_0001>
module attributes {stable_mosaic.version = 11 : i64} {
  func.func @kernel(%arg0: i32, %arg1: i32, %arg2: memref<8x8x48xf32, #tpu.memory_space<vmem>>, %arg3: memref<8x256xf32, #tpu.memory_space<vmem>>, %arg4: memref<8x256xf32, #tpu.memory_space<vmem>>, %arg5: memref<48x1024xbf16, #tpu.memory_space<vmem>>, %arg6: memref<256x1024xbf16, #tpu.memory_space<vmem>>, %arg7: memref<1x1024xf32, #tpu.memory_space<vmem>>, %arg8: memref<256x128xbf16, #tpu.memory_space<vmem>>, %arg9: memref<1x128xf32, #tpu.memory_space<vmem>>, %arg10: memref<128x128xbf16, #tpu.memory_space<vmem>>, %arg11: memref<1x128xf32, #tpu.memory_space<vmem>>, %arg12: memref<8x8x128xbf16, #tpu.memory_space<vmem>>, %arg13: memref<8x256xf32, #tpu.memory_space<vmem>>, %arg14: memref<8x256xf32, #tpu.memory_space<vmem>>, %arg15: memref<8x256xf32, #tpu.memory_space<vmem>>, %arg16: memref<8x256xf32, #tpu.memory_space<vmem>>) attributes {dimension_semantics = [#tpu.dimension_semantics<parallel>, #tpu.dimension_semantics<arbitrary>], iteration_bounds = array<i64: 1, 1>, scalar_prefetch = 0 : i64, scratch_operands = 2 : i64, tpu.core_type = #tpu.core_type<tc>, window_params = [{transform_indices = @transform_0, window_bounds = array<i64: 8, 8, 48>}, {transform_indices = @transform_1, window_bounds = array<i64: 8, 256>}, {transform_indices = @transform_2, window_bounds = array<i64: 8, 256>}, {pipeline_mode = #tpu.pipeline_mode<synchronous>, transform_indices = @transform_3, window_bounds = array<i64: 48, 1024>}, {pipeline_mode = #tpu.pipeline_mode<synchronous>, transform_indices = @transform_4, window_bounds = array<i64: 256, 1024>}, {pipeline_mode = #tpu.pipeline_mode<synchronous>, transform_indices = @transform_5, window_bounds = array<i64: 1, 1024>}, {pipeline_mode = #tpu.pipeline_mode<synchronous>, transform_indices = @transform_6, window_bounds = array<i64: 256, 128>}, {pipeline_mode = #tpu.pipeline_mode<synchronous>, transform_indices = @transform_7, window_bounds = array<i64: 1, 128>}, {pipeline_mode = #tpu.pipeline_mode<synchronous>, transform_indices = @transform_8, window_bounds = array<i64: 128, 128>}, {pipeline_mode = #tpu.pipeline_mode<synchronous>, transform_indices = @transform_9, window_bounds = array<i64: 1, 128>}, {transform_indices = @transform_10, window_bounds = array<i64: 8, 8, 128>}, {transform_indices = @transform_11, window_bounds = array<i64: 8, 256>}, {transform_indices = @transform_12, window_bounds = array<i64: 8, 256>}]} {
    %c0_i32 = arith.constant 0 : i32
    %0 = arith.cmpi eq, %arg1, %c0_i32 : i32
    %1 = arith.extui %0 : i1 to i32
    %c0_i32_0 = arith.constant 0 : i32
    %2 = arith.cmpi ne, %1, %c0_i32_0 : i32
    scf.if %2 {
      %c0 = arith.constant 0 : index
      %c0_5 = arith.constant 0 : index
      %7 = vector.load %arg3[%c0, %c0_5] : memref<8x256xf32, #tpu.memory_space<vmem>>, vector<8x256xf32>
      %c0_6 = arith.constant 0 : index
      %c0_7 = arith.constant 0 : index
      %8 = vector.load %arg15[%c0_6, %c0_7] : memref<8x256xf32, #tpu.memory_space<vmem>>, vector<8x256xf32>
      tpu.vector_store %arg15[%c0_6, %c0_7], %7 {strides = array<i32>} : memref<8x256xf32, #tpu.memory_space<vmem>>, vector<8x256xf32>,
      %c0_8 = arith.constant 0 : index
      %c0_9 = arith.constant 0 : index
      %9 = vector.load %arg4[%c0_8, %c0_9] : memref<8x256xf32, #tpu.memory_space<vmem>>, vector<8x256xf32>
      %c0_10 = arith.constant 0 : index
      %c0_11 = arith.constant 0 : index
      %10 = vector.load %arg16[%c0_10, %c0_11] : memref<8x256xf32, #tpu.memory_space<vmem>>, vector<8x256xf32>
      tpu.vector_store %arg16[%c0_10, %c0_11], %9 {strides = array<i32>} : memref<8x256xf32, #tpu.memory_space<vmem>>, vector<8x256xf32>,
    } else {
    }
    %c0_i32_1 = arith.constant 0 : i32
    %c8_i32 = arith.constant 8 : i32
    %3 = arith.addi %c0_i32_1, %c8_i32 : i32
    %c1_i32 = arith.constant 1 : i32
    scf.for %arg17 = %c0_i32_1 to %3 step %c1_i32  : i32 {
      %c1_i32_5 = arith.constant 1 : i32
      %7 = arith.muli %arg17, %c1_i32_5 : i32
      %c0_i32_6 = arith.constant 0 : i32
      %8 = arith.addi %c0_i32_6, %7 : i32
      %9 = arith.index_cast %8 : i32 to index
      %c0 = arith.constant 0 : index
      %c0_7 = arith.constant 0 : index
      %10 = vector.load %arg2[%9, %c0, %c0_7] : memref<8x8x48xf32, #tpu.memory_space<vmem>>, vector<1x8x48xf32>
      %11 = vector.shape_cast %10 : vector<1x8x48xf32> to vector<8x48xf32>
      %12 = arith.truncf %11 : vector<8x48xf32> to vector<8x48xbf16>
      %c0_8 = arith.constant 0 : index
      %c0_9 = arith.constant 0 : index
      %13 = vector.load %arg15[%c0_8, %c0_9] : memref<8x256xf32, #tpu.memory_space<vmem>>, vector<8x256xf32>
      %c0_10 = arith.constant 0 : index
      %c0_11 = arith.constant 0 : index
      %14 = vector.load %arg16[%c0_10, %c0_11] : memref<8x256xf32, #tpu.memory_space<vmem>>, vector<8x256xf32>
      %c0_12 = arith.constant 0 : index
      %c0_13 = arith.constant 0 : index
      %15 = vector.load %arg5[%c0_12, %c0_13] : memref<48x1024xbf16, #tpu.memory_space<vmem>>, vector<48x1024xbf16>
      %cst = arith.constant dense<0.000000e+00> : vector<8x1024xf32>
      %16 = tpu.matmul %12, %15, %cst {dimension_numbers = #tpu.dot_dimension_numbers<[1], [0], [0], [1], [0, 0, 1, 1], [], []>} : vector<8x48xbf16>, vector<48x1024xbf16>, vector<8x1024xf32> -> vector<8x1024xf32>
      %17 = arith.truncf %13 : vector<8x256xf32> to vector<8x256xbf16>
      %c0_14 = arith.constant 0 : index
      %c0_15 = arith.constant 0 : index
      %18 = vector.load %arg6[%c0_14, %c0_15] : memref<256x1024xbf16, #tpu.memory_space<vmem>>, vector<256x1024xbf16>
      %cst_16 = arith.constant dense<0.000000e+00> : vector<8x1024xf32>
      %19 = tpu.matmul %17, %18, %cst_16 {dimension_numbers = #tpu.dot_dimension_numbers<[1], [0], [0], [1], [0, 0, 1, 1], [], []>} : vector<8x256xbf16>, vector<256x1024xbf16>, vector<8x1024xf32> -> vector<8x1024xf32>
      %20 = arith.addf %16, %19 : vector<8x1024xf32>
      %c0_17 = arith.constant 0 : index
      %c0_18 = arith.constant 0 : index
      %21 = vector.load %arg7[%c0_17, %c0_18] : memref<1x1024xf32, #tpu.memory_space<vmem>>, vector<1x1024xf32>
      %22 = vector.broadcast %21 : vector<1x1024xf32> to vector<8x1024xf32>
      %23 = arith.addf %20, %22 : vector<8x1024xf32>
      %24 = arith.truncf %23 : vector<8x1024xf32> to vector<8x1024xbf16>
      %25 = vector.extract_strided_slice %24 {offsets = [0, 0], sizes = [8, 256], strides = [1, 1]} : vector<8x1024xbf16> to vector<8x256xbf16>
      %cst_19 = arith.constant 5.000000e-01 : bf16
      %26 = vector.broadcast %cst_19 : bf16 to vector<8x256xbf16>
      %27 = arith.mulf %26, %25 : vector<8x256xbf16>
      %28 = math.tanh %27 : vector<8x256xbf16>
      %cst_20 = arith.constant 5.000000e-01 : bf16
      %29 = vector.broadcast %cst_20 : bf16 to vector<8x256xbf16>
      %30 = arith.mulf %29, %28 : vector<8x256xbf16>
      %cst_21 = arith.constant 5.000000e-01 : bf16
      %31 = vector.broadcast %cst_21 : bf16 to vector<8x256xbf16>
      %32 = arith.addf %30, %31 : vector<8x256xbf16>
      %33 = arith.extf %32 : vector<8x256xbf16> to vector<8x256xf32>
      %34 = vector.extract_strided_slice %24 {offsets = [0, 256], sizes = [8, 256], strides = [1, 1]} : vector<8x1024xbf16> to vector<8x256xbf16>
      %cst_22 = arith.constant 5.000000e-01 : bf16
      %35 = vector.broadcast %cst_22 : bf16 to vector<8x256xbf16>
      %36 = arith.mulf %35, %34 : vector<8x256xbf16>
      %37 = math.tanh %36 : vector<8x256xbf16>
      %cst_23 = arith.constant 5.000000e-01 : bf16
      %38 = vector.broadcast %cst_23 : bf16 to vector<8x256xbf16>
      %39 = arith.mulf %38, %37 : vector<8x256xbf16>
      %cst_24 = arith.constant 5.000000e-01 : bf16
      %40 = vector.broadcast %cst_24 : bf16 to vector<8x256xbf16>
      %41 = arith.addf %39, %40 : vector<8x256xbf16>
      %42 = arith.extf %41 : vector<8x256xbf16> to vector<8x256xf32>
      %43 = vector.extract_strided_slice %24 {offsets = [0, 512], sizes = [8, 256], strides = [1, 1]} : vector<8x1024xbf16> to vector<8x256xbf16>
      %44 = math.tanh %43 : vector<8x256xbf16>
      %45 = arith.extf %44 : vector<8x256xbf16> to vector<8x256xf32>
      %46 = vector.extract_strided_slice %24 {offsets = [0, 768], sizes = [8, 256], strides = [1, 1]} : vector<8x1024xbf16> to vector<8x256xbf16>
      %cst_25 = arith.constant 5.000000e-01 : bf16
      %47 = vector.broadcast %cst_25 : bf16 to vector<8x256xbf16>
      %48 = arith.mulf %47, %46 : vector<8x256xbf16>
      %49 = math.tanh %48 : vector<8x256xbf16>
      %cst_26 = arith.constant 5.000000e-01 : bf16
      %50 = vector.broadcast %cst_26 : bf16 to vector<8x256xbf16>
      %51 = arith.mulf %50, %49 : vector<8x256xbf16>
      %cst_27 = arith.constant 5.000000e-01 : bf16
      %52 = vector.broadcast %cst_27 : bf16 to vector<8x256xbf16>
      %53 = arith.addf %51, %52 : vector<8x256xbf16>
      %54 = arith.extf %53 : vector<8x256xbf16> to vector<8x256xf32>
      %55 = arith.mulf %42, %14 : vector<8x256xf32>
      %56 = arith.mulf %33, %45 : vector<8x256xf32>
      %57 = arith.addf %55, %56 : vector<8x256xf32>
      %58 = arith.truncf %57 : vector<8x256xf32> to vector<8x256xbf16>
      %59 = math.tanh %58 : vector<8x256xbf16>
      %60 = arith.extf %59 : vector<8x256xbf16> to vector<8x256xf32>
      %61 = arith.mulf %54, %60 : vector<8x256xf32>
      %c0_28 = arith.constant 0 : index
      %c0_29 = arith.constant 0 : index
      %62 = vector.load %arg15[%c0_28, %c0_29] : memref<8x256xf32, #tpu.memory_space<vmem>>, vector<8x256xf32>
      tpu.vector_store %arg15[%c0_28, %c0_29], %61 {strides = array<i32>} : memref<8x256xf32, #tpu.memory_space<vmem>>, vector<8x256xf32>,
      %c0_30 = arith.constant 0 : index
      %c0_31 = arith.constant 0 : index
      %63 = vector.load %arg16[%c0_30, %c0_31] : memref<8x256xf32, #tpu.memory_space<vmem>>, vector<8x256xf32>
      tpu.vector_store %arg16[%c0_30, %c0_31], %57 {strides = array<i32>} : memref<8x256xf32, #tpu.memory_space<vmem>>, vector<8x256xf32>,
      %64 = arith.truncf %61 : vector<8x256xf32> to vector<8x256xbf16>
      %c0_32 = arith.constant 0 : index
      %c0_33 = arith.constant 0 : index
      %65 = vector.load %arg8[%c0_32, %c0_33] : memref<256x128xbf16, #tpu.memory_space<vmem>>, vector<256x128xbf16>
      %cst_34 = arith.constant dense<0.000000e+00> : vector<8x128xf32>
      %66 = tpu.matmul %64, %65, %cst_34 {dimension_numbers = #tpu.dot_dimension_numbers<[1], [0], [0], [1], [0, 0, 1, 1], [], []>} : vector<8x256xbf16>, vector<256x128xbf16>, vector<8x128xf32> -> vector<8x128xf32>
      %c0_35 = arith.constant 0 : index
      %c0_36 = arith.constant 0 : index
      %67 = vector.load %arg9[%c0_35, %c0_36] : memref<1x128xf32, #tpu.memory_space<vmem>>, vector<1x128xf32>
      %68 = vector.broadcast %67 : vector<1x128xf32> to vector<8x128xf32>
      %69 = arith.addf %66, %68 : vector<8x128xf32>
      %cst_37 = arith.constant 0.000000e+00 : f32
      %70 = vector.broadcast %cst_37 : f32 to vector<8x128xf32>
      %71 = arith.cmpf ogt, %69, %70 : vector<8x128xf32>
      %cst_38 = arith.constant 0.000000e+00 : f32
      %72 = vector.broadcast %cst_38 : f32 to vector<8x128xf32>
      %73 = arith.minimumf %69, %72 : vector<8x128xf32>
      %74 = math.exp %73 : vector<8x128xf32>
      %cst_39 = arith.constant 1.000000e+00 : f32
      %75 = vector.broadcast %cst_39 : f32 to vector<8x128xf32>
      %76 = arith.subf %74, %75 : vector<8x128xf32>
      %77 = arith.select %71, %69, %76 : vector<8x128xi1>, vector<8x128xf32>
      %78 = arith.truncf %77 : vector<8x128xf32> to vector<8x128xbf16>
      %c0_40 = arith.constant 0 : index
      %c0_41 = arith.constant 0 : index
      %79 = vector.load %arg10[%c0_40, %c0_41] : memref<128x128xbf16, #tpu.memory_space<vmem>>, vector<128x128xbf16>
      %cst_42 = arith.constant dense<0.000000e+00> : vector<8x128xf32>
      %80 = tpu.matmul %78, %79, %cst_42 {dimension_numbers = #tpu.dot_dimension_numbers<[1], [0], [0], [1], [0, 0, 1, 1], [], []>} : vector<8x128xbf16>, vector<128x128xbf16>, vector<8x128xf32> -> vector<8x128xf32>
      %c0_43 = arith.constant 0 : index
      %c0_44 = arith.constant 0 : index
      %81 = vector.load %arg11[%c0_43, %c0_44] : memref<1x128xf32, #tpu.memory_space<vmem>>, vector<1x128xf32>
      %82 = vector.broadcast %81 : vector<1x128xf32> to vector<8x128xf32>
      %83 = arith.addf %80, %82 : vector<8x128xf32>
      %84 = arith.truncf %83 : vector<8x128xf32> to vector<8x128xbf16>
      %85 = arith.index_cast %8 : i32 to index
      %c0_45 = arith.constant 0 : index
      %c0_46 = arith.constant 0 : index
      %86 = vector.load %arg12[%85, %c0_45, %c0_46] : memref<8x8x128xbf16, #tpu.memory_space<vmem>>, vector<1x8x128xbf16>
      %87 = vector.shape_cast %86 : vector<1x8x128xbf16> to vector<8x128xbf16>
      %88 = vector.shape_cast %84 : vector<8x128xbf16> to vector<1x8x128xbf16>
      tpu.vector_store %arg12[%85, %c0_45, %c0_46], %88 {strides = array<i32>} : memref<8x8x128xbf16, #tpu.memory_space<vmem>>, vector<1x8x128xbf16>,
    }
    %c8_i32_2 = arith.constant 8 : i32
    %c0_i32_3 = arith.constant 0 : i32
    %4 = arith.cmpi eq, %arg1, %c0_i32_3 : i32
    %5 = arith.extui %4 : i1 to i32
    %c0_i32_4 = arith.constant 0 : i32
    %6 = arith.cmpi ne, %5, %c0_i32_4 : i32
    scf.if %6 {
      %c0 = arith.constant 0 : index
      %c0_5 = arith.constant 0 : index
      %7 = vector.load %arg15[%c0, %c0_5] : memref<8x256xf32, #tpu.memory_space<vmem>>, vector<8x256xf32>
      %c0_6 = arith.constant 0 : index
      %c0_7 = arith.constant 0 : index
      %8 = vector.load %arg13[%c0_6, %c0_7] : memref<8x256xf32, #tpu.memory_space<vmem>>, vector<8x256xf32>
      tpu.vector_store %arg13[%c0_6, %c0_7], %7 {strides = array<i32>} : memref<8x256xf32, #tpu.memory_space<vmem>>, vector<8x256xf32>,
      %c0_8 = arith.constant 0 : index
      %c0_9 = arith.constant 0 : index
      %9 = vector.load %arg16[%c0_8, %c0_9] : memref<8x256xf32, #tpu.memory_space<vmem>>, vector<8x256xf32>
      %c0_10 = arith.constant 0 : index
      %c0_11 = arith.constant 0 : index
      %10 = vector.load %arg14[%c0_10, %c0_11] : memref<8x256xf32, #tpu.memory_space<vmem>>, vector<8x256xf32>
      tpu.vector_store %arg14[%c0_10, %c0_11], %9 {strides = array<i32>} : memref<8x256xf32, #tpu.memory_space<vmem>>, vector<8x256xf32>,
    } else {
    }
    return
  }
  func.func @transform_0(%arg0: i32, %arg1: i32) -> (i32, i32, i32) {
    %c0_i32 = arith.constant 0 : i32
    %c0_i32_0 = arith.constant 0 : i32
    return %arg1, %arg0, %c0_i32 : i32, i32, i32
  }
  func.func @transform_1(%arg0: i32, %arg1: i32) -> (i32, i32) {
    %c0_i32 = arith.constant 0 : i32
    %c0_i32_0 = arith.constant 0 : i32
    return %arg0, %c0_i32 : i32, i32
  }
  func.func @transform_2(%arg0: i32, %arg1: i32) -> (i32, i32) {
    %c0_i32 = arith.constant 0 : i32
    %c0_i32_0 = arith.constant 0 : i32
    return %arg0, %c0_i32 : i32, i32
  }
  func.func @transform_3(%arg0: i32, %arg1: i32) -> (i32, i32) {
    %c0_i32 = arith.constant 0 : i32
    %c0_i32_0 = arith.constant 0 : i32
    %c0_i32_1 = arith.constant 0 : i32
    return %c0_i32, %c0_i32_0 : i32, i32
  }
  func.func @transform_4(%arg0: i32, %arg1: i32) -> (i32, i32) {
    %c0_i32 = arith.constant 0 : i32
    %c0_i32_0 = arith.constant 0 : i32
    %c0_i32_1 = arith.constant 0 : i32
    return %c0_i32, %c0_i32_0 : i32, i32
  }
  func.func @transform_5(%arg0: i32, %arg1: i32) -> (i32, i32) {
    %c0_i32 = arith.constant 0 : i32
    %c0_i32_0 = arith.constant 0 : i32
    %c0_i32_1 = arith.constant 0 : i32
    return %c0_i32, %c0_i32_0 : i32, i32
  }
  func.func @transform_6(%arg0: i32, %arg1: i32) -> (i32, i32) {
    %c0_i32 = arith.constant 0 : i32
    %c0_i32_0 = arith.constant 0 : i32
    %c0_i32_1 = arith.constant 0 : i32
    return %c0_i32, %c0_i32_0 : i32, i32
  }
  func.func @transform_7(%arg0: i32, %arg1: i32) -> (i32, i32) {
    %c0_i32 = arith.constant 0 : i32
    %c0_i32_0 = arith.constant 0 : i32
    %c0_i32_1 = arith.constant 0 : i32
    return %c0_i32, %c0_i32_0 : i32, i32
  }
  func.func @transform_8(%arg0: i32, %arg1: i32) -> (i32, i32) {
    %c0_i32 = arith.constant 0 : i32
    %c0_i32_0 = arith.constant 0 : i32
    %c0_i32_1 = arith.constant 0 : i32
    return %c0_i32, %c0_i32_0 : i32, i32
  }
  func.func @transform_9(%arg0: i32, %arg1: i32) -> (i32, i32) {
    %c0_i32 = arith.constant 0 : i32
    %c0_i32_0 = arith.constant 0 : i32
    %c0_i32_1 = arith.constant 0 : i32
    return %c0_i32, %c0_i32_0 : i32, i32
  }
  func.func @transform_10(%arg0: i32, %arg1: i32) -> (i32, i32, i32) {
    %c0_i32 = arith.constant 0 : i32
    %c0_i32_0 = arith.constant 0 : i32
    return %arg1, %arg0, %c0_i32 : i32, i32, i32
  }
  func.func @transform_11(%arg0: i32, %arg1: i32) -> (i32, i32) {
    %c0_i32 = arith.constant 0 : i32
    %c0_i32_0 = arith.constant 0 : i32
    return %arg0, %c0_i32 : i32, i32
  }
  func.func @transform_12(%arg0: i32, %arg1: i32) -> (i32, i32) {
    %c0_i32 = arith.constant 0 : i32
    %c0_i32_0 = arith.constant 0 : i32
    return %arg0, %c0_i32 : i32, i32
  }
}

</mosaic_0001>

<llo_original>
// kernel: tpu_custom_call.1
$region0: #{tpu_custom_call.1}
  #allocation0 [shape = 'u32[]', space=smem, size = 0x4, offset = 0x4, fixed_abs, tag = 'smem constant byte address 0x4 - core index']
  #allocation1 [shape = 'u32[144,128]{1,0:T(1,128)}', space=vmem, size = 0x12000, scoped, tag = 'internal scratch']
  #allocation2 [shape = 'f32[8,256]{1,0:T(8,128)}', space=vmem, size = 0x2000, scoped, tag = 'scratch operand']
  #allocation3 [shape = 'f32[8,256]{1,0:T(8,128)}', space=vmem, size = 0x2000, scoped, tag = 'scratch operand']
  %s0 = inlined_call_operand.hbm [shape: f32[8,8,48], index: 0, kind: input, shape index: {}]
  %s1 = inlined_call_operand.hbm [shape: f32[8,256], index: 1, kind: input, shape index: {}]
  %s2 = inlined_call_operand.hbm [shape: f32[8,256], index: 2, kind: input, shape index: {}]
  %s3 = inlined_call_operand.hbm [shape: bf16[48,1024], index: 3, kind: input, shape index: {}]
  %s4 = inlined_call_operand.hbm [shape: bf16[256,1024], index: 4, kind: input, shape index: {}]
  %s5 = inlined_call_operand.vmem [shape: f32[1,1024], index: 5, kind: input, shape index: {}]
  %s6 = inlined_call_operand.hbm [shape: bf16[256,128], index: 6, kind: input, shape index: {}]
  %s7 = inlined_call_operand.vmem [shape: f32[1,128], index: 7, kind: input, shape index: {}]
  %s8 = inlined_call_operand.hbm [shape: bf16[128,128], index: 8, kind: input, shape index: {}]
  %s9 = inlined_call_operand.vmem [shape: f32[1,128], index: 9, kind: input, shape index: {}]
  %s10 = inlined_call_operand.hbm [shape: bf16[8,8,128], index: 10, kind: output, shape index: {0}]
  %s11 = inlined_call_operand.hbm [shape: f32[8,256], index: 11, kind: output, shape index: {1}]
  %s12 = inlined_call_operand.hbm [shape: f32[8,256], index: 12, kind: output, shape index: {2}]
  %13 = xla_tuple %s10, %s11, %s12
  %s14 = sld [smem:[#allocation0]]
  $region109: #{tpu_custom_call.1} parent=0
    _
  %s16 = ssub.s32 1, %s14
  %s17 = scalar_select 0, %s16, %s14
  $region1: #{tpu_custom_call.1} parent=0
    #allocation4 [shape = 'u8[32768]{0}', space=vmem, size = 0x8000, scoped, tag = 'input window, operand 0, single buffered']
    #allocation5 [shape = 's32[1]{0}', space=sflag, size = 0x4, scoped, tag = 'scoped memory for tpu_custom_call.1']
    #allocation6 [shape = 's32[1]{0}', space=sflag, size = 0x4, scoped, tag = 'scoped memory for tpu_custom_call.1']
    #allocation7 [shape = 'u8[8192]{0}', space=vmem, size = 0x2000, scoped, tag = 'input window, operand 1, single buffered']
    #allocation8 [shape = 's32[1]{0}', space=sflag, size = 0x4, scoped, tag = 'scoped memory for tpu_custom_call.1']
    #allocation9 [shape = 'u8[8192]{0}', space=vmem, size = 0x2000, scoped, tag = 'input window, operand 2, single buffered']
    #allocation10 [shape = 'u8[98304]{0}', space=vmem, size = 0x18000, scoped, tag = 'input window, operand 3, single buffered']
    #allocation11 [shape = 's32[1]{0}', space=sflag, size = 0x4, scoped, tag = 'scoped memory for tpu_custom_call.1']
    #allocation12 [shape = 'u8[524288]{0}', space=vmem, size = 0x80000, scoped, tag = 'input window, operand 4, single buffered']
    #allocation13 [shape = 'u8[65536]{0}', space=vmem, size = 0x10000, scoped, tag = 'input window, operand 6, single buffered']
    #allocation14 [shape = 's32[1]{0}', space=sflag, size = 0x4, scoped, tag = 'scoped memory for tpu_custom_call.1']
    #allocation15 [shape = 'u8[32768]{0}', space=vmem, size = 0x8000, scoped, tag = 'input window, operand 8, single buffered']
    #allocation16 [shape = 'u8[16384]{0}', space=vmem, size = 0x4000, scoped, tag = 'output window, operand 0, single buffered']
    #allocation17 [shape = 'u8[8192]{0}', space=vmem, size = 0x2000, scoped, tag = 'output window, operand 1, single buffered']
    #allocation18 [shape = 's32[1]{0}', space=sflag, size = 0x4, scoped, tag = 'scoped memory for tpu_custom_call.1']
    #allocation19 [shape = 'u8[8192]{0}', space=vmem, size = 0x2000, scoped, tag = 'output window, operand 2, single buffered']
    %18 = vsyncpa [#allocation5], 0
    %19 = vsyncpa [#allocation8], 0
    %20 = vsyncpa [#allocation11], 0
    %21 = vsyncpa [#allocation14], 0
    %22 = vsyncpa [#allocation6], 0
    %23 = vsyncpa [#allocation18], 0
    // Predicated region
    $region2: #{tpu_custom_call.1} parent=1 // pred_check
      _
    $region3: #{tpu_custom_call.1} parent=1 // pred_check_branch
      %25 = sbr.rel (0) target = $region5
    $region4: #{tpu_custom_call.1} parent=1 // pred_region
      %s27 = ssub.s32 1024, 1024
      %28 = vsyncadd [#allocation5], %s27
      %s29 = sshll.u32 [#allocation4], 4
      %s30 = int_to_ptr.vmem [resolvable:$true] %s29
      %35 = dma.hbm_to_vmem [thread:$0]  %s0, 1024, %s30, [#allocation5], 128, 128, 8
    $region5: #{tpu_custom_call.1} parent=1 // pred_fallthru
      _
    // Predicated region
    $region6: #{tpu_custom_call.1} parent=1 // pred_check
      _
    $region7: #{tpu_custom_call.1} parent=1 // pred_check_branch
      %37 = sbr.rel (0) target = $region9
    $region8: #{tpu_custom_call.1} parent=1 // pred_region
      %s39 = ssub.s32 256, 256
      %40 = vsyncadd [#allocation8], %s39
      %s42 = sshll.u32 [#allocation7], 4
      %s43 = int_to_ptr.vmem [resolvable:$true] %s42
      %45 = dma.hbm_to_vmem [thread:$0]  %s1, 256, %s43, [#allocation8]
    $region9: #{tpu_custom_call.1} parent=1 // pred_fallthru
      _
    // Predicated region
    $region10: #{tpu_custom_call.1} parent=1 // pred_check
      _
    $region11: #{tpu_custom_call.1} parent=1 // pred_check_branch
      %47 = sbr.rel (0) target = $region13
    $region12: #{tpu_custom_call.1} parent=1 // pred_region
      %s49 = ssub.s32 256, 256
      %50 = vsyncadd [#allocation8], %s49
      %s52 = sshll.u32 [#allocation9], 4
      %s53 = int_to_ptr.vmem [resolvable:$true] %s52
      %55 = dma.hbm_to_vmem [thread:$0]  %s2, 256, %s53, [#allocation8]
    $region13: #{tpu_custom_call.1} parent=1 // pred_fallthru
      _
    // Predicated region
    $region14: #{tpu_custom_call.1} parent=1 // pred_check
      _
    $region15: #{tpu_custom_call.1} parent=1 // pred_check_branch
      %57 = sbr.rel (0) target = $region17
    $region16: #{tpu_custom_call.1} parent=1 // pred_region
      %s59 = ssub.s32 3072, 3072
      %60 = vsyncadd [#allocation11], %s59
      %s61 = sshll.u32 [#allocation10], 4
      %s62 = int_to_ptr.vmem [resolvable:$true] %s61
      %67 = dma.hbm_to_vmem [thread:$0]  %s3, 3072, %s62, [#allocation11], 512, 512, 32
    $region17: #{tpu_custom_call.1} parent=1 // pred_fallthru
      _
    // Predicated region
    $region18: #{tpu_custom_call.1} parent=1 // pred_check
      _
    $region19: #{tpu_custom_call.1} parent=1 // pred_check_branch
      %69 = sbr.rel (0) target = $region21
    $region20: #{tpu_custom_call.1} parent=1 // pred_region
      %s71 = ssub.s32 16384, 16384
      %72 = vsyncadd [#allocation11], %s71
      %s73 = sshll.u32 [#allocation12], 4
      %s74 = int_to_ptr.vmem [resolvable:$true] %s73
      %79 = dma.hbm_to_vmem [thread:$0]  %s4, 16384, %s74, [#allocation11], 512, 512, 32
    $region21: #{tpu_custom_call.1} parent=1 // pred_fallthru
      _
    // Predicated region
    $region22: #{tpu_custom_call.1} parent=1 // pred_check
      _
    $region23: #{tpu_custom_call.1} parent=1 // pred_check_branch
      %81 = sbr.rel (0) target = $region25
    $region24: #{tpu_custom_call.1} parent=1 // pred_region
      _
    $region25: #{tpu_custom_call.1} parent=1 // pred_fallthru
      _
    // Predicated region
    $region26: #{tpu_custom_call.1} parent=1 // pred_check
      _
    $region27: #{tpu_custom_call.1} parent=1 // pred_check_branch
      %83 = sbr.rel (0) target = $region29
    $region28: #{tpu_custom_call.1} parent=1 // pred_region
      %s85 = ssub.s32 2048, 2048
      %86 = vsyncadd [#allocation14], %s85
      %s87 = sshll.u32 [#allocation13], 4
      %s88 = int_to_ptr.vmem [resolvable:$true] %s87
      %93 = dma.hbm_to_vmem [thread:$0]  %s6, 2048, %s88, [#allocation14], 64, 64, 4
    $region29: #{tpu_custom_call.1} parent=1 // pred_fallthru
      _
    // Predicated region
    $region30: #{tpu_custom_call.1} parent=1 // pred_check
      _
    $region31: #{tpu_custom_call.1} parent=1 // pred_check_branch
      %95 = sbr.rel (0) target = $region33
    $region32: #{tpu_custom_call.1} parent=1 // pred_region
      _
    $region33: #{tpu_custom_call.1} parent=1 // pred_fallthru
      _
    // Predicated region
    $region34: #{tpu_custom_call.1} parent=1 // pred_check
      _
    $region35: #{tpu_custom_call.1} parent=1 // pred_check_branch
      %97 = sbr.rel (0) target = $region37
    $region36: #{tpu_custom_call.1} parent=1 // pred_region
      %s99 = ssub.s32 1024, 1024
      %100 = vsyncadd [#allocation14], %s99
      %s101 = sshll.u32 [#allocation15], 4
      %s102 = int_to_ptr.vmem [resolvable:$true] %s101
      %107 = dma.hbm_to_vmem [thread:$0]  %s8, 1024, %s102, [#allocation14], 64, 64, 4
    $region37: #{tpu_custom_call.1} parent=1 // pred_fallthru
      _
    // Predicated region
    $region38: #{tpu_custom_call.1} parent=1 // pred_check
      _
    $region39: #{tpu_custom_call.1} parent=1 // pred_check_branch
      %109 = sbr.rel (0) target = $region41
    $region40: #{tpu_custom_call.1} parent=1 // pred_region
      _
    $region41: #{tpu_custom_call.1} parent=1 // pred_fallthru
      _
    // Predicated region
    $region42: #{tpu_custom_call.1} parent=1 // pred_check
      _
    $region43: #{tpu_custom_call.1} parent=1 // pred_check_branch
      %111 = sbr.rel (0) target = $region45
    $region44: #{tpu_custom_call.1} parent=1 // pred_region
      %112 = dma.done [#allocation5], 1024
    $region45: #{tpu_custom_call.1} parent=1 // pred_fallthru
      _
    // Predicated region
    $region46: #{tpu_custom_call.1} parent=1 // pred_check
      _
    $region47: #{tpu_custom_call.1} parent=1 // pred_check_branch
      %114 = sbr.rel (0) target = $region49
    $region48: #{tpu_custom_call.1} parent=1 // pred_region
      %115 = dma.done [#allocation8], 256
    $region49: #{tpu_custom_call.1} parent=1 // pred_fallthru
      _
    // Predicated region
    $region50: #{tpu_custom_call.1} parent=1 // pred_check
      _
    $region51: #{tpu_custom_call.1} parent=1 // pred_check_branch
      %117 = sbr.rel (0) target = $region53
    $region52: #{tpu_custom_call.1} parent=1 // pred_region
      %118 = dma.done [#allocation8], 256
    $region53: #{tpu_custom_call.1} parent=1 // pred_fallthru
      _
    // Predicated region
    $region54: #{tpu_custom_call.1} parent=1 // pred_check
      _
    $region55: #{tpu_custom_call.1} parent=1 // pred_check_branch
      %120 = sbr.rel (0) target = $region57
    $region56: #{tpu_custom_call.1} parent=1 // pred_region
      %121 = dma.done [#allocation11], 3072
    $region57: #{tpu_custom_call.1} parent=1 // pred_fallthru
      _
    // Predicated region
    $region58: #{tpu_custom_call.1} parent=1 // pred_check
      _
    $region59: #{tpu_custom_call.1} parent=1 // pred_check_branch
      %123 = sbr.rel (0) target = $region61
    $region60: #{tpu_custom_call.1} parent=1 // pred_region
      %124 = dma.done [#allocation11], 16384
    $region61: #{tpu_custom_call.1} parent=1 // pred_fallthru
      _
    // Predicated region
    $region62: #{tpu_custom_call.1} parent=1 // pred_check
      _
    $region63: #{tpu_custom_call.1} parent=1 // pred_check_branch
      %126 = sbr.rel (0) target = $region65
    $region64: #{tpu_custom_call.1} parent=1 // pred_region
      %127 = dma.done [#allocation14], 2048
    $region65: #{tpu_custom_call.1} parent=1 // pred_fallthru
      _
    // Predicated region
    $region66: #{tpu_custom_call.1} parent=1 // pred_check
      _
    $region67: #{tpu_custom_call.1} parent=1 // pred_check_branch
      %129 = sbr.rel (0) target = $region69
    $region68: #{tpu_custom_call.1} parent=1 // pred_region
      %130 = dma.done [#allocation14], 1024
    $region69: #{tpu_custom_call.1} parent=1 // pred_fallthru
      _
    %p133 = scmp.eq.s32.totalorder 0, 0
    // Predicated region
    $region70: #{tpu_custom_call.1} parent=1 // pred_check
      %p134 = pneg %p133
    $region71: #{tpu_custom_call.1} parent=1 // pred_check_branch
      %136 = sbr.rel (%p134) target = $region73
    $region72: #{tpu_custom_call.1} parent=1 // pred_region
      %v137 = vld [vmem:[#allocation7] sm:$0xff]
      %v138 = vld [vmem:[#allocation7 + $0x8] sm:$0xff]
      %139 = vst [vmem:[#allocation2] sm:$0xff] %v137
      %140 = vst [vmem:[#allocation2 + $0x8] sm:$0xff] %v138
      %v141 = vld [vmem:[#allocation9] sm:$0xff]
      %v142 = vld [vmem:[#allocation9 + $0x8] sm:$0xff]
      %143 = vst [vmem:[#allocation3] sm:$0xff] %v141
      %144 = vst [vmem:[#allocation3 + $0x8] sm:$0xff] %v142
    $region73: #{tpu_custom_call.1} parent=1 // pred_fallthru
      _
    loop: start=0, step=1, limit=8
    $region74: #{tpu_custom_call.1} parent=1 // loop_pre_header
      _
    $region75: #{tpu_custom_call.1} parent=1 // loop_header
      %s146 = sphi 0, %s150
      %p147 = scmp.ge.s32.totalorder %s146, 8
    $region76: #{tpu_custom_call.1} parent=1 // loop_header_branch
      %149 = sbr.rel (%p147) target = $region80
    $region77: #{tpu_custom_call.1} parent=1 // loop_body
      %s151 = smul.u32 %s146, 8
      %s152 = scalar_lea.vmem [#allocation4], %s151
      %v153 = vld [vmem:[%s152] sm:$0xff]
      %v154 = vpack.c.bf16 %v153, %v153
      %v155 = vld [vmem:[#allocation2] sm:$0xff]
      %v156 = vld [vmem:[#allocation2 + $0x8] sm:$0xff]
      %v157 = vld [vmem:[#allocation3] sm:$0xff]
      %v158 = vld [vmem:[#allocation3 + $0x8] sm:$0xff]
      %v159 = vld [vmem:[#allocation10] sm:$0xff]
      %v160 = vld [vmem:[#allocation10 + $0x8] sm:$0xff]
      %v161 = vld [vmem:[#allocation10 + $0x10] sm:$0xff]
      %v162 = vld [vmem:[#allocation10 + $0x18] sm:$0xff]
      %v163 = vld [vmem:[#allocation10 + $0x20] sm:$0xff]
      %v164 = vld [vmem:[#allocation10 + $0x28] sm:$0xff]
      %v165 = vld [vmem:[#allocation10 + $0x30] sm:$0xff]
      %v166 = vld [vmem:[#allocation10 + $0x38] sm:$0xff]
      %v167 = vld [vmem:[#allocation10 + $0x40] sm:$0xff]
      %v168 = vld [vmem:[#allocation10 + $0x48] sm:$0xff]
      %v169 = vld [vmem:[#allocation10 + $0x50] sm:$0xff]
      %v170 = vld [vmem:[#allocation10 + $0x58] sm:$0xff]
      %v171 = vld [vmem:[#allocation10 + $0x60] sm:$0xff]
      %v172 = vld [vmem:[#allocation10 + $0x68] sm:$0xff]
      %v173 = vld [vmem:[#allocation10 + $0x70] sm:$0xff]
      %v174 = vld [vmem:[#allocation10 + $0x78] sm:$0xff]
      %v175 = vld [vmem:[#allocation10 + $0x80] sm:$0xff]
      %v176 = vld [vmem:[#allocation10 + $0x88] sm:$0xff]
      %v177 = vld [vmem:[#allocation10 + $0x90] sm:$0xff]
      %v178 = vld [vmem:[#allocation10 + $0x98] sm:$0xff]
      %v179 = vld [vmem:[#allocation10 + $0xa0] sm:$0xff]
      %v180 = vld [vmem:[#allocation10 + $0xa8] sm:$0xff]
      %v181 = vld [vmem:[#allocation10 + $0xb0] sm:$0xff]
      %v182 = vld [vmem:[#allocation10 + $0xb8] sm:$0xff]
      %v183 = vpack.c.bf16 %v155, %v155
      %v184 = vpack.c.bf16 %v156, %v156
      %v185 = vld [vmem:[#allocation12] sm:$0xff]
      %v186 = vld [vmem:[#allocation12 + $0x8] sm:$0xff]
      %v187 = vld [vmem:[#allocation12 + $0x10] sm:$0xff]
      %v188 = vld [vmem:[#allocation12 + $0x18] sm:$0xff]
      %v189 = vld [vmem:[#allocation12 + $0x20] sm:$0xff]
      %v190 = vld [vmem:[#allocation12 + $0x28] sm:$0xff]
      %v191 = vld [vmem:[#allocation12 + $0x30] sm:$0xff]
      %v192 = vld [vmem:[#allocation12 + $0x38] sm:$0xff]
      %v193 = vld [vmem:[#allocation12 + $0x40] sm:$0xff]
      %v194 = vld [vmem:[#allocation12 + $0x48] sm:$0xff]
      %v195 = vld [vmem:[#allocation12 + $0x50] sm:$0xff]
      %v196 = vld [vmem:[#allocation12 + $0x58] sm:$0xff]
      %v197 = vld [vmem:[#allocation12 + $0x60] sm:$0xff]
      %v198 = vld [vmem:[#allocation12 + $0x68] sm:$0xff]
      %v199 = vld [vmem:[#allocation12 + $0x70] sm:$0xff]
      %v200 = vld [vmem:[#allocation12 + $0x78] sm:$0xff]
      %v201 = vld [vmem:[#allocation12 + $0x80] sm:$0xff]
      %v202 = vld [vmem:[#allocation12 + $0x88] sm:$0xff]
      %v203 = vld [vmem:[#allocation12 + $0x90] sm:$0xff]
      %v204 = vld [vmem:[#allocation12 + $0x98] sm:$0xff]
      %v205 = vld [vmem:[#allocation12 + $0xa0] sm:$0xff]
      %v206 = vld [vmem:[#allocation12 + $0xa8] sm:$0xff]
      %v207 = vld [vmem:[#allocation12 + $0xb0] sm:$0xff]
      %v208 = vld [vmem:[#allocation12 + $0xb8] sm:$0xff]
      %v209 = vld [vmem:[#allocation12 + $0xc0] sm:$0xff]
      %v210 = vld [vmem:[#allocation12 + $0xc8] sm:$0xff]
      %v211 = vld [vmem:[#allocation12 + $0xd0] sm:$0xff]
      %v212 = vld [vmem:[#allocation12 + $0xd8] sm:$0xff]
      %v213 = vld [vmem:[#allocation12 + $0xe0] sm:$0xff]
      %v214 = vld [vmem:[#allocation12 + $0xe8] sm:$0xff]
      %v215 = vld [vmem:[#allocation12 + $0xf0] sm:$0xff]
      %v216 = vld [vmem:[#allocation12 + $0xf8] sm:$0xff]
      %v217 = vld [vmem:[#allocation12 + $0x100] sm:$0xff]
      %v218 = vld [vmem:[#allocation12 + $0x108] sm:$0xff]
      %v219 = vld [vmem:[#allocation12 + $0x110] sm:$0xff]
      %v220 = vld [vmem:[#allocation12 + $0x118] sm:$0xff]
      %v221 = vld [vmem:[#allocation12 + $0x120] sm:$0xff]
      %v222 = vld [vmem:[#allocation12 + $0x128] sm:$0xff]
      %v223 = vld [vmem:[#allocation12 + $0x130] sm:$0xff]
      %v224 = vld [vmem:[#allocation12 + $0x138] sm:$0xff]
      %v225 = vld [vmem:[#allocation12 + $0x140] sm:$0xff]
      %v226 = vld [vmem:[#allocation12 + $0x148] sm:$0xff]
      %v227 = vld [vmem:[#allocation12 + $0x150] sm:$0xff]
      %v228 = vld [vmem:[#allocation12 + $0x158] sm:$0xff]
      %v229 = vld [vmem:[#allocation12 + $0x160] sm:$0xff]
      %v230 = vld [vmem:[#allocation12 + $0x168] sm:$0xff]
      %v231 = vld [vmem:[#allocation12 + $0x170] sm:$0xff]
      %v232 = vld [vmem:[#allocation12 + $0x178] sm:$0xff]
      %v233 = vld [vmem:[#allocation12 + $0x180] sm:$0xff]
      %v234 = vld [vmem:[#allocation12 + $0x188] sm:$0xff]
      %v235 = vld [vmem:[#allocation12 + $0x190] sm:$0xff]
      %v236 = vld [vmem:[#allocation12 + $0x198] sm:$0xff]
      %v237 = vld [vmem:[#allocation12 + $0x1a0] sm:$0xff]
      %v238 = vld [vmem:[#allocation12 + $0x1a8] sm:$0xff]
      %v239 = vld [vmem:[#allocation12 + $0x1b0] sm:$0xff]
      %v240 = vld [vmem:[#allocation12 + $0x1b8] sm:$0xff]
      %v241 = vld [vmem:[#allocation12 + $0x1c0] sm:$0xff]
      %v242 = vld [vmem:[#allocation12 + $0x1c8] sm:$0xff]
      %v243 = vld [vmem:[#allocation12 + $0x1d0] sm:$0xff]
      %v244 = vld [vmem:[#allocation12 + $0x1d8] sm:$0xff]
      %v245 = vld [vmem:[#allocation12 + $0x1e0] sm:$0xff]
      %v246 = vld [vmem:[#allocation12 + $0x1e8] sm:$0xff]
      %v247 = vld [vmem:[#allocation12 + $0x1f0] sm:$0xff]
      %v248 = vld [vmem:[#allocation12 + $0x1f8] sm:$0xff]
      %v249 = vld [vmem:[#allocation12 + $0x200] sm:$0xff]
      %v250 = vld [vmem:[#allocation12 + $0x208] sm:$0xff]
      %v251 = vld [vmem:[#allocation12 + $0x210] sm:$0xff]
      %v252 = vld [vmem:[#allocation12 + $0x218] sm:$0xff]
      %v253 = vld [vmem:[#allocation12 + $0x220] sm:$0xff]
      %v254 = vld [vmem:[#allocation12 + $0x228] sm:$0xff]
      %v255 = vld [vmem:[#allocation12 + $0x230] sm:$0xff]
      %v256 = vld [vmem:[#allocation12 + $0x238] sm:$0xff]
      %v257 = vld [vmem:[#allocation12 + $0x240] sm:$0xff]
      %v258 = vld [vmem:[#allocation12 + $0x248] sm:$0xff]
      %v259 = vld [vmem:[#allocation12 + $0x250] sm:$0xff]
      %v260 = vld [vmem:[#allocation12 + $0x258] sm:$0xff]
      %v261 = vld [vmem:[#allocation12 + $0x260] sm:$0xff]
      %v262 = vld [vmem:[#allocation12 + $0x268] sm:$0xff]
      %v263 = vld [vmem:[#allocation12 + $0x270] sm:$0xff]
      %v264 = vld [vmem:[#allocation12 + $0x278] sm:$0xff]
      %v265 = vld [vmem:[#allocation12 + $0x280] sm:$0xff]
      %v266 = vld [vmem:[#allocation12 + $0x288] sm:$0xff]
      %v267 = vld [vmem:[#allocation12 + $0x290] sm:$0xff]
      %v268 = vld [vmem:[#allocation12 + $0x298] sm:$0xff]
      %v269 = vld [vmem:[#allocation12 + $0x2a0] sm:$0xff]
      %v270 = vld [vmem:[#allocation12 + $0x2a8] sm:$0xff]
      %v271 = vld [vmem:[#allocation12 + $0x2b0] sm:$0xff]
      %v272 = vld [vmem:[#allocation12 + $0x2b8] sm:$0xff]
      %v273 = vld [vmem:[#allocation12 + $0x2c0] sm:$0xff]
      %v274 = vld [vmem:[#allocation12 + $0x2c8] sm:$0xff]
      %v275 = vld [vmem:[#allocation12 + $0x2d0] sm:$0xff]
      %v276 = vld [vmem:[#allocation12 + $0x2d8] sm:$0xff]
      %v277 = vld [vmem:[#allocation12 + $0x2e0] sm:$0xff]
      %v278 = vld [vmem:[#allocation12 + $0x2e8] sm:$0xff]
      %v279 = vld [vmem:[#allocation12 + $0x2f0] sm:$0xff]
      %v280 = vld [vmem:[#allocation12 + $0x2f8] sm:$0xff]
      %v281 = vld [vmem:[#allocation12 + $0x300] sm:$0xff]
      %v282 = vld [vmem:[#allocation12 + $0x308] sm:$0xff]
      %v283 = vld [vmem:[#allocation12 + $0x310] sm:$0xff]
      %v284 = vld [vmem:[#allocation12 + $0x318] sm:$0xff]
      %v285 = vld [vmem:[#allocation12 + $0x320] sm:$0xff]
      %v286 = vld [vmem:[#allocation12 + $0x328] sm:$0xff]
      %v287 = vld [vmem:[#allocation12 + $0x330] sm:$0xff]
      %v288 = vld [vmem:[#allocation12 + $0x338] sm:$0xff]
      %v289 = vld [vmem:[#allocation12 + $0x340] sm:$0xff]
      %v290 = vld [vmem:[#allocation12 + $0x348] sm:$0xff]
      %v291 = vld [vmem:[#allocation12 + $0x350] sm:$0xff]
      %v292 = vld [vmem:[#allocation12 + $0x358] sm:$0xff]
      %v293 = vld [vmem:[#allocation12 + $0x360] sm:$0xff]
      %v294 = vld [vmem:[#allocation12 + $0x368] sm:$0xff]
      %v295 = vld [vmem:[#allocation12 + $0x370] sm:$0xff]
      %v296 = vld [vmem:[#allocation12 + $0x378] sm:$0xff]
      %v297 = vld [vmem:[#allocation12 + $0x380] sm:$0xff]
      %v298 = vld [vmem:[#allocation12 + $0x388] sm:$0xff]
      %v299 = vld [vmem:[#allocation12 + $0x390] sm:$0xff]
      %v300 = vld [vmem:[#allocation12 + $0x398] sm:$0xff]
      %v301 = vld [vmem:[#allocation12 + $0x3a0] sm:$0xff]
      %v302 = vld [vmem:[#allocation12 + $0x3a8] sm:$0xff]
      %v303 = vld [vmem:[#allocation12 + $0x3b0] sm:$0xff]
      %v304 = vld [vmem:[#allocation12 + $0x3b8] sm:$0xff]
      %v305 = vld [vmem:[#allocation12 + $0x3c0] sm:$0xff]
      %v306 = vld [vmem:[#allocation12 + $0x3c8] sm:$0xff]
      %v307 = vld [vmem:[#allocation12 + $0x3d0] sm:$0xff]
      %v308 = vld [vmem:[#allocation12 + $0x3d8] sm:$0xff]
      %v309 = vld [vmem:[#allocation12 + $0x3e0] sm:$0xff]
      %v310 = vld [vmem:[#allocation12 + $0x3e8] sm:$0xff]
      %v311 = vld [vmem:[#allocation12 + $0x3f0] sm:$0xff]
      %v312 = vld [vmem:[#allocation12 + $0x3f8] sm:$0xff]
      %v441 = vunpack.c.l.b16 %v185
      %v442 = vunpack.c.h.b16 %v185
      %v443 = vunpack.c.l.b16 %v186
      %v444 = vunpack.c.h.b16 %v186
      %v445 = vunpack.c.l.b16 %v187
      %v446 = vunpack.c.h.b16 %v187
      %v447 = vunpack.c.l.b16 %v188
      %v448 = vunpack.c.h.b16 %v188
      %v449 = vunpack.c.l.b16 %v189
      %v450 = vunpack.c.h.b16 %v189
      %v451 = vunpack.c.l.b16 %v190
      %v452 = vunpack.c.h.b16 %v190
      %v453 = vunpack.c.l.b16 %v191
      %v454 = vunpack.c.h.b16 %v191
      %v455 = vunpack.c.l.b16 %v192
      %v456 = vunpack.c.h.b16 %v192
      %v457 = vunpack.c.l.b16 %v193
      %v458 = vunpack.c.h.b16 %v193
      %v459 = vunpack.c.l.b16 %v194
      %v460 = vunpack.c.h.b16 %v194
      %v461 = vunpack.c.l.b16 %v195
      %v462 = vunpack.c.h.b16 %v195
      %v463 = vunpack.c.l.b16 %v196
      %v464 = vunpack.c.h.b16 %v196
      %v465 = vunpack.c.l.b16 %v197
      %v466 = vunpack.c.h.b16 %v197
      %v467 = vunpack.c.l.b16 %v198
      %v468 = vunpack.c.h.b16 %v198
      %v469 = vunpack.c.l.b16 %v199
      %v470 = vunpack.c.h.b16 %v199
      %v471 = vunpack.c.l.b16 %v200
      %v472 = vunpack.c.h.b16 %v200
      %v473 = vunpack.c.l.b16 %v201
      %v474 = vunpack.c.h.b16 %v201
      %v475 = vunpack.c.l.b16 %v202
      %v476 = vunpack.c.h.b16 %v202
      %v477 = vunpack.c.l.b16 %v203
      %v478 = vunpack.c.h.b16 %v203
      %v479 = vunpack.c.l.b16 %v204
      %v480 = vunpack.c.h.b16 %v204
      %v481 = vunpack.c.l.b16 %v205
      %v482 = vunpack.c.h.b16 %v205
      %v483 = vunpack.c.l.b16 %v206
      %v484 = vunpack.c.h.b16 %v206
      %v485 = vunpack.c.l.b16 %v207
      %v486 = vunpack.c.h.b16 %v207
      %v487 = vunpack.c.l.b16 %v208
      %v488 = vunpack.c.h.b16 %v208
      %v489 = vunpack.c.l.b16 %v209
      %v490 = vunpack.c.h.b16 %v209
      %v491 = vunpack.c.l.b16 %v210
      %v492 = vunpack.c.h.b16 %v210
      %v493 = vunpack.c.l.b16 %v211
      %v494 = vunpack.c.h.b16 %v211
      %v495 = vunpack.c.l.b16 %v212
      %v496 = vunpack.c.h.b16 %v212
      %v497 = vunpack.c.l.b16 %v213
      %v498 = vunpack.c.h.b16 %v213
      %v499 = vunpack.c.l.b16 %v214
      %v500 = vunpack.c.h.b16 %v214
      %v501 = vunpack.c.l.b16 %v215
      %v502 = vunpack.c.h.b16 %v215
      %v503 = vunpack.c.l.b16 %v216
      %v504 = vunpack.c.h.b16 %v216
      %v505 = vunpack.c.l.b16 %v217
      %v506 = vunpack.c.h.b16 %v217
      %v507 = vunpack.c.l.b16 %v218
      %v508 = vunpack.c.h.b16 %v218
      %v509 = vunpack.c.l.b16 %v219
      %v510 = vunpack.c.h.b16 %v219
      %v511 = vunpack.c.l.b16 %v220
      %v512 = vunpack.c.h.b16 %v220
      %v513 = vunpack.c.l.b16 %v221
      %v514 = vunpack.c.h.b16 %v221
      %v515 = vunpack.c.l.b16 %v222
      %v516 = vunpack.c.h.b16 %v222
      %v517 = vunpack.c.l.b16 %v223
      %v518 = vunpack.c.h.b16 %v223
      %v519 = vunpack.c.l.b16 %v224
      %v520 = vunpack.c.h.b16 %v224
      %v521 = vunpack.c.l.b16 %v225
      %v522 = vunpack.c.h.b16 %v225
      %v523 = vunpack.c.l.b16 %v226
      %v524 = vunpack.c.h.b16 %v226
      %v525 = vunpack.c.l.b16 %v227
      %v526 = vunpack.c.h.b16 %v227
      %v527 = vunpack.c.l.b16 %v228
      %v528 = vunpack.c.h.b16 %v228
      %v529 = vunpack.c.l.b16 %v229
      %v530 = vunpack.c.h.b16 %v229
      %v531 = vunpack.c.l.b16 %v230
      %v532 = vunpack.c.h.b16 %v230
      %v533 = vunpack.c.l.b16 %v231
      %v534 = vunpack.c.h.b16 %v231
      %v535 = vunpack.c.l.b16 %v232
      %v536 = vunpack.c.h.b16 %v232
      %v537 = vunpack.c.l.b16 %v233
      %v538 = vunpack.c.h.b16 %v233
      %v539 = vunpack.c.l.b16 %v234
      %v540 = vunpack.c.h.b16 %v234
      %v541 = vunpack.c.l.b16 %v235
      %v542 = vunpack.c.h.b16 %v235
      %v543 = vunpack.c.l.b16 %v236
      %v544 = vunpack.c.h.b16 %v236
      %v545 = vunpack.c.l.b16 %v237
      %v546 = vunpack.c.h.b16 %v237
      %v547 = vunpack.c.l.b16 %v238
      %v548 = vunpack.c.h.b16 %v238
      %v549 = vunpack.c.l.b16 %v239
      %v550 = vunpack.c.h.b16 %v239
      %v551 = vunpack.c.l.b16 %v240
      %v552 = vunpack.c.h.b16 %v240
      %v553 = vunpack.c.l.b16 %v241
      %v554 = vunpack.c.h.b16 %v241
      %v555 = vunpack.c.l.b16 %v242
      %v556 = vunpack.c.h.b16 %v242
      %v557 = vunpack.c.l.b16 %v243
      %v558 = vunpack.c.h.b16 %v243
      %v559 = vunpack.c.l.b16 %v244
      %v560 = vunpack.c.h.b16 %v244
      %v561 = vunpack.c.l.b16 %v245
      %v562 = vunpack.c.h.b16 %v245
      %v563 = vunpack.c.l.b16 %v246
      %v564 = vunpack.c.h.b16 %v246
      %v565 = vunpack.c.l.b16 %v247
      %v566 = vunpack.c.h.b16 %v247
      %v567 = vunpack.c.l.b16 %v248
      %v568 = vunpack.c.h.b16 %v248
      %v569 = vunpack.c.l.b16 %v249
      %v570 = vunpack.c.h.b16 %v249
      %v571 = vunpack.c.l.b16 %v250
      %v572 = vunpack.c.h.b16 %v250
      %v573 = vunpack.c.l.b16 %v251
      %v574 = vunpack.c.h.b16 %v251
      %v575 = vunpack.c.l.b16 %v252
      %v576 = vunpack.c.h.b16 %v252
      %v577 = vunpack.c.l.b16 %v253
      %v578 = vunpack.c.h.b16 %v253
      %v579 = vunpack.c.l.b16 %v254
      %v580 = vunpack.c.h.b16 %v254
      %v581 = vunpack.c.l.b16 %v255
      %v582 = vunpack.c.h.b16 %v255
      %v583 = vunpack.c.l.b16 %v256
      %v584 = vunpack.c.h.b16 %v256
      %v585 = vunpack.c.l.b16 %v257
      %v586 = vunpack.c.h.b16 %v257
      %v587 = vunpack.c.l.b16 %v258
      %v588 = vunpack.c.h.b16 %v258
      %v589 = vunpack.c.l.b16 %v259
      %v590 = vunpack.c.h.b16 %v259
      %v591 = vunpack.c.l.b16 %v260
      %v592 = vunpack.c.h.b16 %v260
      %v593 = vunpack.c.l.b16 %v261
      %v594 = vunpack.c.h.b16 %v261
      %v595 = vunpack.c.l.b16 %v262
      %v596 = vunpack.c.h.b16 %v262
      %v597 = vunpack.c.l.b16 %v263
      %v598 = vunpack.c.h.b16 %v263
      %v599 = vunpack.c.l.b16 %v264
      %v600 = vunpack.c.h.b16 %v264
      %v601 = vunpack.c.l.b16 %v265
      %v602 = vunpack.c.h.b16 %v265
      %v603 = vunpack.c.l.b16 %v266
      %v604 = vunpack.c.h.b16 %v266
      %v605 = vunpack.c.l.b16 %v267
      %v606 = vunpack.c.h.b16 %v267
      %v607 = vunpack.c.l.b16 %v268
      %v608 = vunpack.c.h.b16 %v268
      %v609 = vunpack.c.l.b16 %v269
      %v610 = vunpack.c.h.b16 %v269
      %v611 = vunpack.c.l.b16 %v270
      %v612 = vunpack.c.h.b16 %v270
      %v613 = vunpack.c.l.b16 %v271
      %v614 = vunpack.c.h.b16 %v271
      %v615 = vunpack.c.l.b16 %v272
      %v616 = vunpack.c.h.b16 %v272
      %v617 = vunpack.c.l.b16 %v273
      %v618 = vunpack.c.h.b16 %v273
      %v619 = vunpack.c.l.b16 %v274
      %v620 = vunpack.c.h.b16 %v274
      %v621 = vunpack.c.l.b16 %v275
      %v622 = vunpack.c.h.b16 %v275
      %v623 = vunpack.c.l.b16 %v276
      %v624 = vunpack.c.h.b16 %v276
      %v625 = vunpack.c.l.b16 %v277
      %v626 = vunpack.c.h.b16 %v277
      %v627 = vunpack.c.l.b16 %v278
      %v628 = vunpack.c.h.b16 %v278
      %v629 = vunpack.c.l.b16 %v279
      %v630 = vunpack.c.h.b16 %v279
      %v631 = vunpack.c.l.b16 %v280
      %v632 = vunpack.c.h.b16 %v280
      %v633 = vunpack.c.l.b16 %v281
      %v634 = vunpack.c.h.b16 %v281
      %v635 = vunpack.c.l.b16 %v282
      %v636 = vunpack.c.h.b16 %v282
      %v637 = vunpack.c.l.b16 %v283
      %v638 = vunpack.c.h.b16 %v283
      %v639 = vunpack.c.l.b16 %v284
      %v640 = vunpack.c.h.b16 %v284
      %v641 = vunpack.c.l.b16 %v285
      %v642 = vunpack.c.h.b16 %v285
      %v643 = vunpack.c.l.b16 %v286
      %v644 = vunpack.c.h.b16 %v286
      %v645 = vunpack.c.l.b16 %v287
      %v646 = vunpack.c.h.b16 %v287
      %v647 = vunpack.c.l.b16 %v288
      %v648 = vunpack.c.h.b16 %v288
      %v649 = vunpack.c.l.b16 %v289
      %v650 = vunpack.c.h.b16 %v289
      %v651 = vunpack.c.l.b16 %v290
      %v652 = vunpack.c.h.b16 %v290
      %v653 = vunpack.c.l.b16 %v291
      %v654 = vunpack.c.h.b16 %v291
      %v655 = vunpack.c.l.b16 %v292
      %v656 = vunpack.c.h.b16 %v292
      %v657 = vunpack.c.l.b16 %v293
      %v658 = vunpack.c.h.b16 %v293
      %v659 = vunpack.c.l.b16 %v294
      %v660 = vunpack.c.h.b16 %v294
      %v661 = vunpack.c.l.b16 %v295
      %v662 = vunpack.c.h.b16 %v295
      %v663 = vunpack.c.l.b16 %v296
      %v664 = vunpack.c.h.b16 %v296
      %v665 = vunpack.c.l.b16 %v297
      %v666 = vunpack.c.h.b16 %v297
      %v667 = vunpack.c.l.b16 %v298
      %v668 = vunpack.c.h.b16 %v298
      %v669 = vunpack.c.l.b16 %v299
      %v670 = vunpack.c.h.b16 %v299
      %v671 = vunpack.c.l.b16 %v300
      %v672 = vunpack.c.h.b16 %v300
      %v673 = vunpack.c.l.b16 %v301
      %v674 = vunpack.c.h.b16 %v301
      %v675 = vunpack.c.l.b16 %v302
      %v676 = vunpack.c.h.b16 %v302
      %v677 = vunpack.c.l.b16 %v303
      %v678 = vunpack.c.h.b16 %v303
      %v679 = vunpack.c.l.b16 %v304
      %v680 = vunpack.c.h.b16 %v304
      %v681 = vunpack.c.l.b16 %v305
      %v682 = vunpack.c.h.b16 %v305
      %v683 = vunpack.c.l.b16 %v306
      %v684 = vunpack.c.h.b16 %v306
      %v685 = vunpack.c.l.b16 %v307
      %v686 = vunpack.c.h.b16 %v307
      %v687 = vunpack.c.l.b16 %v308
      %v688 = vunpack.c.h.b16 %v308
      %v689 = vunpack.c.l.b16 %v309
      %v690 = vunpack.c.h.b16 %v309
      %v691 = vunpack.c.l.b16 %v310
      %v692 = vunpack.c.h.b16 %v310
      %v693 = vunpack.c.l.b16 %v311
      %v694 = vunpack.c.h.b16 %v311
      %v695 = vunpack.c.l.b16 %v312
      %v696 = vunpack.c.h.b16 %v312
      %v697 = vpack.c.b16 %v449, %v441
      %v698 = vpack.c.b16 %v450, %v442
      %v699 = vpack.c.b16 %v451, %v443
      %v700 = vpack.c.b16 %v452, %v444
      %v701 = vpack.c.b16 %v453, %v445
      %v702 = vpack.c.b16 %v454, %v446
      %v703 = vpack.c.b16 %v455, %v447
      %v704 = vpack.c.b16 %v456, %v448
      %v705 = vpack.c.b16 %v465, %v457
      %v706 = vpack.c.b16 %v466, %v458
      %v707 = vpack.c.b16 %v467, %v459
      %v708 = vpack.c.b16 %v468, %v460
      %v709 = vpack.c.b16 %v469, %v461
      %v710 = vpack.c.b16 %v470, %v462
      %v711 = vpack.c.b16 %v471, %v463
      %v712 = vpack.c.b16 %v472, %v464
      %v713 = vpack.c.b16 %v481, %v473
      %v714 = vpack.c.b16 %v482, %v474
      %v715 = vpack.c.b16 %v483, %v475
      %v716 = vpack.c.b16 %v484, %v476
      %v717 = vpack.c.b16 %v485, %v477
      %v718 = vpack.c.b16 %v486, %v478
      %v719 = vpack.c.b16 %v487, %v479
      %v720 = vpack.c.b16 %v488, %v480
      %v721 = vpack.c.b16 %v497, %v489
      %v722 = vpack.c.b16 %v498, %v490
      %v723 = vpack.c.b16 %v499, %v491
      %v724 = vpack.c.b16 %v500, %v492
      %v725 = vpack.c.b16 %v501, %v493
      %v726 = vpack.c.b16 %v502, %v494
      %v727 = vpack.c.b16 %v503, %v495
      %v728 = vpack.c.b16 %v504, %v496
      %v729 = vpack.c.b16 %v513, %v505
      %v730 = vpack.c.b16 %v514, %v506
      %v731 = vpack.c.b16 %v515, %v507
      %v732 = vpack.c.b16 %v516, %v508
      %v733 = vpack.c.b16 %v517, %v509
      %v734 = vpack.c.b16 %v518, %v510
      %v735 = vpack.c.b16 %v519, %v511
      %v736 = vpack.c.b16 %v520, %v512
      %v737 = vpack.c.b16 %v529, %v521
      %v738 = vpack.c.b16 %v530, %v522
      %v739 = vpack.c.b16 %v531, %v523
      %v740 = vpack.c.b16 %v532, %v524
      %v741 = vpack.c.b16 %v533, %v525
      %v742 = vpack.c.b16 %v534, %v526
      %v743 = vpack.c.b16 %v535, %v527
      %v744 = vpack.c.b16 %v536, %v528
      %v745 = vpack.c.b16 %v545, %v537
      %v746 = vpack.c.b16 %v546, %v538
      %v747 = vpack.c.b16 %v547, %v539
      %v748 = vpack.c.b16 %v548, %v540
      %v749 = vpack.c.b16 %v549, %v541
      %v750 = vpack.c.b16 %v550, %v542
      %v751 = vpack.c.b16 %v551, %v543
      %v752 = vpack.c.b16 %v552, %v544
      %v753 = vpack.c.b16 %v561, %v553
      %v754 = vpack.c.b16 %v562, %v554
      %v755 = vpack.c.b16 %v563, %v555
      %v756 = vpack.c.b16 %v564, %v556
      %v757 = vpack.c.b16 %v565, %v557
      %v758 = vpack.c.b16 %v566, %v558
      %v759 = vpack.c.b16 %v567, %v559
      %v760 = vpack.c.b16 %v568, %v560
      %v761 = vpack.c.b16 %v577, %v569
      %v762 = vpack.c.b16 %v578, %v570
      %v763 = vpack.c.b16 %v579, %v571
      %v764 = vpack.c.b16 %v580, %v572
      %v765 = vpack.c.b16 %v581, %v573
      %v766 = vpack.c.b16 %v582, %v574
      %v767 = vpack.c.b16 %v583, %v575
      %v768 = vpack.c.b16 %v584, %v576
      %v769 = vpack.c.b16 %v593, %v585
      %v770 = vpack.c.b16 %v594, %v586
      %v771 = vpack.c.b16 %v595, %v587
      %v772 = vpack.c.b16 %v596, %v588
      %v773 = vpack.c.b16 %v597, %v589
      %v774 = vpack.c.b16 %v598, %v590
      %v775 = vpack.c.b16 %v599, %v591
      %v776 = vpack.c.b16 %v600, %v592
      %v777 = vpack.c.b16 %v609, %v601
      %v778 = vpack.c.b16 %v610, %v602
      %v779 = vpack.c.b16 %v611, %v603
      %v780 = vpack.c.b16 %v612, %v604
      %v781 = vpack.c.b16 %v613, %v605
      %v782 = vpack.c.b16 %v614, %v606
      %v783 = vpack.c.b16 %v615, %v607
      %v784 = vpack.c.b16 %v616, %v608
      %v785 = vpack.c.b16 %v625, %v617
      %v786 = vpack.c.b16 %v626, %v618
      %v787 = vpack.c.b16 %v627, %v619
      %v788 = vpack.c.b16 %v628, %v620
      %v789 = vpack.c.b16 %v629, %v621
      %v790 = vpack.c.b16 %v630, %v622
      %v791 = vpack.c.b16 %v631, %v623
      %v792 = vpack.c.b16 %v632, %v624
      %v793 = vpack.c.b16 %v641, %v633
      %v794 = vpack.c.b16 %v642, %v634
      %v795 = vpack.c.b16 %v643, %v635
      %v796 = vpack.c.b16 %v644, %v636
      %v797 = vpack.c.b16 %v645, %v637
      %v798 = vpack.c.b16 %v646, %v638
      %v799 = vpack.c.b16 %v647, %v639
      %v800 = vpack.c.b16 %v648, %v640
      %v801 = vpack.c.b16 %v657, %v649
      %v802 = vpack.c.b16 %v658, %v650
      %v803 = vpack.c.b16 %v659, %v651
      %v804 = vpack.c.b16 %v660, %v652
      %v805 = vpack.c.b16 %v661, %v653
      %v806 = vpack.c.b16 %v662, %v654
      %v807 = vpack.c.b16 %v663, %v655
      %v808 = vpack.c.b16 %v664, %v656
      %v809 = vpack.c.b16 %v673, %v665
      %v810 = vpack.c.b16 %v674, %v666
      %v811 = vpack.c.b16 %v675, %v667
      %v812 = vpack.c.b16 %v676, %v668
      %v813 = vpack.c.b16 %v677, %v669
      %v814 = vpack.c.b16 %v678, %v670
      %v815 = vpack.c.b16 %v679, %v671
      %v816 = vpack.c.b16 %v680, %v672
      %v817 = vpack.c.b16 %v689, %v681
      %v818 = vpack.c.b16 %v690, %v682
      %v819 = vpack.c.b16 %v691, %v683
      %v820 = vpack.c.b16 %v692, %v684
      %v821 = vpack.c.b16 %v693, %v685
      %v822 = vpack.c.b16 %v694, %v686
      %v823 = vpack.c.b16 %v695, %v687
      %v824 = vpack.c.b16 %v696, %v688
      %953 = vmatprep.subr.bf16.mxu0 %v698
      %954 = vmatpush1.bf16.msra.mxu0 %v697
      %955 = vmatprep.subr.bf16.mxu0 %v706
      %956 = vmatpush1.bf16.msra.mxu0 %v705
      %957 = vmatprep.subr.bf16.mxu0 %v714
      %958 = vmatpush1.bf16.msra.mxu0 %v713
      %959 = vmatprep.subr.bf16.mxu0 %v722
      %960 = vmatpush1.bf16.msra.mxu0 %v721
      %961 = vmatprep.subr.bf16.mxu0 %v730
      %962 = vmatpush1.bf16.msra.mxu0 %v729
      %963 = vmatprep.subr.bf16.mxu0 %v738
      %964 = vmatpush1.bf16.msra.mxu0 %v737
      %965 = vmatprep.subr.bf16.mxu0 %v746
      %966 = vmatpush1.bf16.msra.mxu0 %v745
      %967 = vmatprep.subr.bf16.mxu0 %v754
      %968 = vmatpush1.bf16.msra.mxu0 %v753
      %969 = vmatprep.subr.bf16.mxu0 %v762
      %970 = vmatpush1.bf16.msra.mxu0 %v761
      %971 = vmatprep.subr.bf16.mxu0 %v770
      %972 = vmatpush1.bf16.msra.mxu0 %v769
      %973 = vmatprep.subr.bf16.mxu0 %v778
      %974 = vmatpush1.bf16.msra.mxu0 %v777
      %975 = vmatprep.subr.bf16.mxu0 %v786
      %976 = vmatpush1.bf16.msra.mxu0 %v785
      %977 = vmatprep.subr.bf16.mxu0 %v794
      %978 = vmatpush1.bf16.msra.mxu0 %v793
      %979 = vmatprep.subr.bf16.mxu0 %v802
      %980 = vmatpush1.bf16.msra.mxu0 %v801
      %981 = vmatprep.subr.bf16.mxu0 %v810
      %982 = vmatpush1.bf16.msra.mxu0 %v809
      %983 = vmatprep.subr.bf16.mxu0 %v818
      %984 = vmatpush1.bf16.msra.mxu0 %v817
      %985 = vmatprep.mubr.bf16.mxu0 %v184
      %986 = vmatmul.mubr.bf16.gmra.mrb[0].mxu0 %v183
      %v987 = vpop.f32.mrb[0].mxu0
      %v988 = vadd.f32 0.0, %v987
      %v989 = vpop.f32.mrb[0].mxu0
      %v990 = vadd.f32 0.0, %v989
      %v991 = vpop.f32.mrb[0].mxu0
      %v992 = vpop.f32.mrb[0].mxu0
      %993 = vdwg.mxu0
      %994 = vmatprep.subr.bf16.mxu0 %v700
      %995 = vmatpush1.bf16.msra.mxu0 %v699
      %996 = vmatprep.subr.bf16.mxu0 %v708
      %997 = vmatpush1.bf16.msra.mxu0 %v707
      %998 = vmatprep.subr.bf16.mxu0 %v716
      %999 = vmatpush1.bf16.msra.mxu0 %v715
      %1000 = vmatprep.subr.bf16.mxu0 %v724
      %1001 = vmatpush1.bf16.msra.mxu0 %v723
      %1002 = vmatprep.subr.bf16.mxu0 %v732
      %1003 = vmatpush1.bf16.msra.mxu0 %v731
      %1004 = vmatprep.subr.bf16.mxu0 %v740
      %1005 = vmatpush1.bf16.msra.mxu0 %v739
      %1006 = vmatprep.subr.bf16.mxu0 %v748
      %1007 = vmatpush1.bf16.msra.mxu0 %v747
      %1008 = vmatprep.subr.bf16.mxu0 %v756
      %1009 = vmatpush1.bf16.msra.mxu0 %v755
      %1010 = vmatprep.subr.bf16.mxu0 %v764
      %1011 = vmatpush1.bf16.msra.mxu0 %v763
      %1012 = vmatprep.subr.bf16.mxu0 %v772
      %1013 = vmatpush1.bf16.msra.mxu0 %v771
      %1014 = vmatprep.subr.bf16.mxu0 %v780
      %1015 = vmatpush1.bf16.msra.mxu0 %v779
      %1016 = vmatprep.subr.bf16.mxu0 %v788
      %1017 = vmatpush1.bf16.msra.mxu0 %v787
      %1018 = vmatprep.subr.bf16.mxu0 %v796
      %1019 = vmatpush1.bf16.msra.mxu0 %v795
      %1020 = vmatprep.subr.bf16.mxu0 %v804
      %1021 = vmatpush1.bf16.msra.mxu0 %v803
      %1022 = vmatprep.subr.bf16.mxu0 %v812
      %1023 = vmatpush1.bf16.msra.mxu0 %v811
      %1024 = vmatprep.subr.bf16.mxu0 %v820
      %1025 = vmatpush1.bf16.msra.mxu0 %v819
      %1026 = vmatprep.mubr.bf16.mxu0 %v184
      %1027 = vmatmul.mubr.bf16.gmra.mrb[0].mxu0 %v183
      %v1028 = vpop.f32.mrb[0].mxu0
      %v1029 = vadd.f32 0.0, %v1028
      %v1030 = vpop.f32.mrb[0].mxu0
      %v1031 = vadd.f32 0.0, %v1030
      %v1032 = vpop.f32.mrb[0].mxu0
      %v1033 = vpop.f32.mrb[0].mxu0
      %1034 = vdwg.mxu0
      %1035 = vmatprep.subr.bf16.mxu0 %v702
      %1036 = vmatpush1.bf16.msra.mxu0 %v701
      %1037 = vmatprep.subr.bf16.mxu0 %v710
      %1038 = vmatpush1.bf16.msra.mxu0 %v709
      %1039 = vmatprep.subr.bf16.mxu0 %v718
      %1040 = vmatpush1.bf16.msra.mxu0 %v717
      %1041 = vmatprep.subr.bf16.mxu0 %v726
      %1042 = vmatpush1.bf16.msra.mxu0 %v725
      %1043 = vmatprep.subr.bf16.mxu0 %v734
      %1044 = vmatpush1.bf16.msra.mxu0 %v733
      %1045 = vmatprep.subr.bf16.mxu0 %v742
      %1046 = vmatpush1.bf16.msra.mxu0 %v741
      %1047 = vmatprep.subr.bf16.mxu0 %v750
      %1048 = vmatpush1.bf16.msra.mxu0 %v749
      %1049 = vmatprep.subr.bf16.mxu0 %v758
      %1050 = vmatpush1.bf16.msra.mxu0 %v757
      %1051 = vmatprep.subr.bf16.mxu0 %v766
      %1052 = vmatpush1.bf16.msra.mxu0 %v765
      %1053 = vmatprep.subr.bf16.mxu0 %v774
      %1054 = vmatpush1.bf16.msra.mxu0 %v773
      %1055 = vmatprep.subr.bf16.mxu0 %v782
      %1056 = vmatpush1.bf16.msra.mxu0 %v781
      %1057 = vmatprep.subr.bf16.mxu0 %v790
      %1058 = vmatpush1.bf16.msra.mxu0 %v789
      %1059 = vmatprep.subr.bf16.mxu0 %v798
      %1060 = vmatpush1.bf16.msra.mxu0 %v797
      %1061 = vmatprep.subr.bf16.mxu0 %v806
      %1062 = vmatpush1.bf16.msra.mxu0 %v805
      %1063 = vmatprep.subr.bf16.mxu0 %v814
      %1064 = vmatpush1.bf16.msra.mxu0 %v813
      %1065 = vmatprep.subr.bf16.mxu0 %v822
      %1066 = vmatpush1.bf16.msra.mxu0 %v821
      %1067 = vmatprep.mubr.bf16.mxu0 %v184
      %1068 = vmatmul.mubr.bf16.gmra.mrb[0].mxu0 %v183
      %v1069 = vpop.f32.mrb[0].mxu0
      %v1070 = vadd.f32 0.0, %v1069
      %v1071 = vpop.f32.mrb[0].mxu0
      %v1072 = vadd.f32 0.0, %v1071
      %v1073 = vpop.f32.mrb[0].mxu0
      %v1074 = vpop.f32.mrb[0].mxu0
      %1075 = vdwg.mxu0
      %1076 = vmatprep.subr.bf16.mxu0 %v704
      %1077 = vmatpush1.bf16.msra.mxu0 %v703
      %1078 = vmatprep.subr.bf16.mxu0 %v712
      %1079 = vmatpush1.bf16.msra.mxu0 %v711
      %1080 = vmatprep.subr.bf16.mxu0 %v720
      %1081 = vmatpush1.bf16.msra.mxu0 %v719
      %1082 = vmatprep.subr.bf16.mxu0 %v728
      %1083 = vmatpush1.bf16.msra.mxu0 %v727
      %1084 = vmatprep.subr.bf16.mxu0 %v736
      %1085 = vmatpush1.bf16.msra.mxu0 %v735
      %1086 = vmatprep.subr.bf16.mxu0 %v744
      %1087 = vmatpush1.bf16.msra.mxu0 %v743
      %1088 = vmatprep.subr.bf16.mxu0 %v752
      %1089 = vmatpush1.bf16.msra.mxu0 %v751
      %1090 = vmatprep.subr.bf16.mxu0 %v760
      %1091 = vmatpush1.bf16.msra.mxu0 %v759
      %1092 = vmatprep.subr.bf16.mxu0 %v768
      %1093 = vmatpush1.bf16.msra.mxu0 %v767
      %1094 = vmatprep.subr.bf16.mxu0 %v776
      %1095 = vmatpush1.bf16.msra.mxu0 %v775
      %1096 = vmatprep.subr.bf16.mxu0 %v784
      %1097 = vmatpush1.bf16.msra.mxu0 %v783
      %1098 = vmatprep.subr.bf16.mxu0 %v792
      %1099 = vmatpush1.bf16.msra.mxu0 %v791
      %1100 = vmatprep.subr.bf16.mxu0 %v800
      %1101 = vmatpush1.bf16.msra.mxu0 %v799
      %1102 = vmatprep.subr.bf16.mxu0 %v808
      %1103 = vmatpush1.bf16.msra.mxu0 %v807
      %1104 = vmatprep.subr.bf16.mxu0 %v816
      %1105 = vmatpush1.bf16.msra.mxu0 %v815
      %1106 = vmatprep.subr.bf16.mxu0 %v824
      %1107 = vmatpush1.bf16.msra.mxu0 %v823
      %1108 = vmatprep.mubr.bf16.mxu0 %v184
      %1109 = vmatmul.mubr.bf16.gmra.mrb[0].mxu0 %v183
      %v1110 = vpop.f32.mrb[0].mxu0
      %v1111 = vadd.f32 0.0, %v1110
      %v1112 = vpop.f32.mrb[0].mxu0
      %v1113 = vadd.f32 0.0, %v1112
      %v1114 = vpop.f32.mrb[0].mxu0
      %v1115 = vpop.f32.mrb[0].mxu0
      %1116 = vdwg.mxu0
      %v1141 = vunpack.c.l.b16 %v159
      %v1142 = vunpack.c.h.b16 %v159
      %v1143 = vunpack.c.l.b16 %v160
      %v1144 = vunpack.c.h.b16 %v160
      %v1145 = vunpack.c.l.b16 %v161
      %v1146 = vunpack.c.h.b16 %v161
      %v1147 = vunpack.c.l.b16 %v162
      %v1148 = vunpack.c.h.b16 %v162
      %v1149 = vunpack.c.l.b16 %v163
      %v1150 = vunpack.c.h.b16 %v163
      %v1151 = vunpack.c.l.b16 %v164
      %v1152 = vunpack.c.h.b16 %v164
      %v1153 = vunpack.c.l.b16 %v165
      %v1154 = vunpack.c.h.b16 %v165
      %v1155 = vunpack.c.l.b16 %v166
      %v1156 = vunpack.c.h.b16 %v166
      %v1157 = vunpack.c.l.b16 %v167
      %v1158 = vunpack.c.h.b16 %v167
      %v1159 = vunpack.c.l.b16 %v168
      %v1160 = vunpack.c.h.b16 %v168
      %v1161 = vunpack.c.l.b16 %v169
      %v1162 = vunpack.c.h.b16 %v169
      %v1163 = vunpack.c.l.b16 %v170
      %v1164 = vunpack.c.h.b16 %v170
      %v1165 = vunpack.c.l.b16 %v171
      %v1166 = vunpack.c.h.b16 %v171
      %v1167 = vunpack.c.l.b16 %v172
      %v1168 = vunpack.c.h.b16 %v172
      %v1169 = vunpack.c.l.b16 %v173
      %v1170 = vunpack.c.h.b16 %v173
      %v1171 = vunpack.c.l.b16 %v174
      %v1172 = vunpack.c.h.b16 %v174
      %v1173 = vunpack.c.l.b16 %v175
      %v1174 = vunpack.c.h.b16 %v175
      %v1175 = vunpack.c.l.b16 %v176
      %v1176 = vunpack.c.h.b16 %v176
      %v1177 = vunpack.c.l.b16 %v177
      %v1178 = vunpack.c.h.b16 %v177
      %v1179 = vunpack.c.l.b16 %v178
      %v1180 = vunpack.c.h.b16 %v178
      %v1181 = vunpack.c.l.b16 %v179
      %v1182 = vunpack.c.h.b16 %v179
      %v1183 = vunpack.c.l.b16 %v180
      %v1184 = vunpack.c.h.b16 %v180
      %v1185 = vunpack.c.l.b16 %v181
      %v1186 = vunpack.c.h.b16 %v181
      %v1187 = vunpack.c.l.b16 %v182
      %v1188 = vunpack.c.h.b16 %v182
      %v1189 = vpack.c.b16 %v1149, %v1141
      %v1190 = vpack.c.b16 %v1150, %v1142
      %v1191 = vpack.c.b16 %v1151, %v1143
      %v1192 = vpack.c.b16 %v1152, %v1144
      %v1193 = vpack.c.b16 %v1153, %v1145
      %v1194 = vpack.c.b16 %v1154, %v1146
      %v1195 = vpack.c.b16 %v1155, %v1147
      %v1196 = vpack.c.b16 %v1156, %v1148
      %v1197 = vpack.c.b16 %v1165, %v1157
      %v1198 = vpack.c.b16 %v1166, %v1158
      %v1199 = vpack.c.b16 %v1167, %v1159
      %v1200 = vpack.c.b16 %v1168, %v1160
      %v1201 = vpack.c.b16 %v1169, %v1161
      %v1202 = vpack.c.b16 %v1170, %v1162
      %v1203 = vpack.c.b16 %v1171, %v1163
      %v1204 = vpack.c.b16 %v1172, %v1164
      %v1205 = vpack.c.b16 %v1181, %v1173
      %v1206 = vpack.c.b16 %v1182, %v1174
      %v1207 = vpack.c.b16 %v1183, %v1175
      %v1208 = vpack.c.b16 %v1184, %v1176
      %v1209 = vpack.c.b16 %v1185, %v1177
      %v1210 = vpack.c.b16 %v1186, %v1178
      %v1211 = vpack.c.b16 %v1187, %v1179
      %v1212 = vpack.c.b16 %v1188, %v1180
      %vm1237 = vcmask 392192
      %v1239 = vsel %vm1237, %v154, 0
      %1241 = vmatprep.subr.bf16.mxu0 %v1190
      %1242 = vmatpush1.bf16.msra.mxu0 %v1189
      %1243 = vmatprep.subr.bf16.mxu0 %v1198
      %1244 = vmatpush1.bf16.msra.mxu0 %v1197
      %1245 = vmatprep.subr.bf16.mxu0 %v1206
      %1246 = vmatpush1.bf16.msra.mxu0 %v1205
      %1247 = vmatprep.subr.bf16.mxu0 0
      %1248 = vmatpush1.bf16.msra.mxu0 0
      %1249 = vmatprep.subr.bf16.mxu0 0
      %1250 = vmatpush1.bf16.msra.mxu0 0
      %1251 = vmatprep.subr.bf16.mxu0 0
      %1252 = vmatpush1.bf16.msra.mxu0 0
      %1253 = vmatprep.subr.bf16.mxu0 0
      %1254 = vmatpush1.bf16.msra.mxu0 0
      %1255 = vmatprep.subr.bf16.mxu0 0
      %1256 = vmatpush1.bf16.msra.mxu0 0
      %1257 = vmatprep.subr.bf16.mxu0 0
      %1258 = vmatpush1.bf16.msra.mxu0 0
      %1259 = vmatprep.subr.bf16.mxu0 0
      %1260 = vmatpush1.bf16.msra.mxu0 0
      %1261 = vmatprep.subr.bf16.mxu0 0
      %1262 = vmatpush1.bf16.msra.mxu0 0
      %1263 = vmatprep.subr.bf16.mxu0 0
      %1264 = vmatpush1.bf16.msra.mxu0 0
      %1265 = vmatprep.subr.bf16.mxu0 0
      %1266 = vmatpush1.bf16.msra.mxu0 0
      %1267 = vmatprep.subr.bf16.mxu0 0
      %1268 = vmatpush1.bf16.msra.mxu0 0
      %1269 = vmatprep.subr.bf16.mxu0 0
      %1270 = vmatpush1.bf16.msra.mxu0 0
      %1271 = vmatprep.subr.bf16.mxu0 0
      %1272 = vmatpush1.bf16.msra.mxu0 0
      %1273 = vmatprep.mubr.bf16.mxu0 0
      %1274 = vmatmul.mubr.bf16.gmra.mrb[0].mxu0 %v1239
      %v1275 = vpop.f32.mrb[0].mxu0
      %v1276 = vadd.f32 %v988, %v1275
      %v1277 = vpop.f32.mrb[0].mxu0
      %v1278 = vadd.f32 %v990, %v1277
      %v1279 = vpop.f32.mrb[0].mxu0
      %v1280 = vpop.f32.mrb[0].mxu0
      %1281 = vdwg.mxu0
      %1282 = vmatprep.subr.bf16.mxu0 %v1192
      %1283 = vmatpush1.bf16.msra.mxu0 %v1191
      %1284 = vmatprep.subr.bf16.mxu0 %v1200
      %1285 = vmatpush1.bf16.msra.mxu0 %v1199
      %1286 = vmatprep.subr.bf16.mxu0 %v1208
      %1287 = vmatpush1.bf16.msra.mxu0 %v1207
      %1288 = vmatprep.subr.bf16.mxu0 0
      %1289 = vmatpush1.bf16.msra.mxu0 0
      %1290 = vmatprep.subr.bf16.mxu0 0
      %1291 = vmatpush1.bf16.msra.mxu0 0
      %1292 = vmatprep.subr.bf16.mxu0 0
      %1293 = vmatpush1.bf16.msra.mxu0 0
      %1294 = vmatprep.subr.bf16.mxu0 0
      %1295 = vmatpush1.bf16.msra.mxu0 0
      %1296 = vmatprep.subr.bf16.mxu0 0
      %1297 = vmatpush1.bf16.msra.mxu0 0
      %1298 = vmatprep.subr.bf16.mxu0 0
      %1299 = vmatpush1.bf16.msra.mxu0 0
      %1300 = vmatprep.subr.bf16.mxu0 0
      %1301 = vmatpush1.bf16.msra.mxu0 0
      %1302 = vmatprep.subr.bf16.mxu0 0
      %1303 = vmatpush1.bf16.msra.mxu0 0
      %1304 = vmatprep.subr.bf16.mxu0 0
      %1305 = vmatpush1.bf16.msra.mxu0 0
      %1306 = vmatprep.subr.bf16.mxu0 0
      %1307 = vmatpush1.bf16.msra.mxu0 0
      %1308 = vmatprep.subr.bf16.mxu0 0
      %1309 = vmatpush1.bf16.msra.mxu0 0
      %1310 = vmatprep.subr.bf16.mxu0 0
      %1311 = vmatpush1.bf16.msra.mxu0 0
      %1312 = vmatprep.subr.bf16.mxu0 0
      %1313 = vmatpush1.bf16.msra.mxu0 0
      %1314 = vmatprep.mubr.bf16.mxu0 0
      %1315 = vmatmul.mubr.bf16.gmra.mrb[0].mxu0 %v1239
      %v1316 = vpop.f32.mrb[0].mxu0
      %v1317 = vadd.f32 %v1029, %v1316
      %v1318 = vpop.f32.mrb[0].mxu0
      %v1319 = vadd.f32 %v1031, %v1318
      %v1320 = vpop.f32.mrb[0].mxu0
      %v1321 = vpop.f32.mrb[0].mxu0
      %1322 = vdwg.mxu0
      %1323 = vmatprep.subr.bf16.mxu0 %v1194
      %1324 = vmatpush1.bf16.msra.mxu0 %v1193
      %1325 = vmatprep.subr.bf16.mxu0 %v1202
      %1326 = vmatpush1.bf16.msra.mxu0 %v1201
      %1327 = vmatprep.subr.bf16.mxu0 %v1210
      %1328 = vmatpush1.bf16.msra.mxu0 %v1209
      %1329 = vmatprep.subr.bf16.mxu0 0
      %1330 = vmatpush1.bf16.msra.mxu0 0
      %1331 = vmatprep.subr.bf16.mxu0 0
      %1332 = vmatpush1.bf16.msra.mxu0 0
      %1333 = vmatprep.subr.bf16.mxu0 0
      %1334 = vmatpush1.bf16.msra.mxu0 0
      %1335 = vmatprep.subr.bf16.mxu0 0
      %1336 = vmatpush1.bf16.msra.mxu0 0
      %1337 = vmatprep.subr.bf16.mxu0 0
      %1338 = vmatpush1.bf16.msra.mxu0 0
      %1339 = vmatprep.subr.bf16.mxu0 0
      %1340 = vmatpush1.bf16.msra.mxu0 0
      %1341 = vmatprep.subr.bf16.mxu0 0
      %1342 = vmatpush1.bf16.msra.mxu0 0
      %1343 = vmatprep.subr.bf16.mxu0 0
      %1344 = vmatpush1.bf16.msra.mxu0 0
      %1345 = vmatprep.subr.bf16.mxu0 0
      %1346 = vmatpush1.bf16.msra.mxu0 0
      %1347 = vmatprep.subr.bf16.mxu0 0
      %1348 = vmatpush1.bf16.msra.mxu0 0
      %1349 = vmatprep.subr.bf16.mxu0 0
      %1350 = vmatpush1.bf16.msra.mxu0 0
      %1351 = vmatprep.subr.bf16.mxu0 0
      %1352 = vmatpush1.bf16.msra.mxu0 0
      %1353 = vmatprep.subr.bf16.mxu0 0
      %1354 = vmatpush1.bf16.msra.mxu0 0
      %1355 = vmatprep.mubr.bf16.mxu0 0
      %1356 = vmatmul.mubr.bf16.gmra.mrb[0].mxu0 %v1239
      %v1357 = vpop.f32.mrb[0].mxu0
      %v1358 = vadd.f32 %v1070, %v1357
      %v1359 = vpop.f32.mrb[0].mxu0
      %v1360 = vadd.f32 %v1072, %v1359
      %v1361 = vpop.f32.mrb[0].mxu0
      %v1362 = vpop.f32.mrb[0].mxu0
      %1363 = vdwg.mxu0
      %1364 = vmatprep.subr.bf16.mxu0 %v1196
      %1365 = vmatpush1.bf16.msra.mxu0 %v1195
      %1366 = vmatprep.subr.bf16.mxu0 %v1204
      %1367 = vmatpush1.bf16.msra.mxu0 %v1203
      %1368 = vmatprep.subr.bf16.mxu0 %v1212
      %1369 = vmatpush1.bf16.msra.mxu0 %v1211
      %1370 = vmatprep.subr.bf16.mxu0 0
      %1371 = vmatpush1.bf16.msra.mxu0 0
      %1372 = vmatprep.subr.bf16.mxu0 0
      %1373 = vmatpush1.bf16.msra.mxu0 0
      %1374 = vmatprep.subr.bf16.mxu0 0
      %1375 = vmatpush1.bf16.msra.mxu0 0
      %1376 = vmatprep.subr.bf16.mxu0 0
      %1377 = vmatpush1.bf16.msra.mxu0 0
      %1378 = vmatprep.subr.bf16.mxu0 0
      %1379 = vmatpush1.bf16.msra.mxu0 0
      %1380 = vmatprep.subr.bf16.mxu0 0
      %1381 = vmatpush1.bf16.msra.mxu0 0
      %1382 = vmatprep.subr.bf16.mxu0 0
      %1383 = vmatpush1.bf16.msra.mxu0 0
      %1384 = vmatprep.subr.bf16.mxu0 0
      %1385 = vmatpush1.bf16.msra.mxu0 0
      %1386 = vmatprep.subr.bf16.mxu0 0
      %1387 = vmatpush1.bf16.msra.mxu0 0
      %1388 = vmatprep.subr.bf16.mxu0 0
      %1389 = vmatpush1.bf16.msra.mxu0 0
      %1390 = vmatprep.subr.bf16.mxu0 0
      %1391 = vmatpush1.bf16.msra.mxu0 0
      %1392 = vmatprep.subr.bf16.mxu0 0
      %1393 = vmatpush1.bf16.msra.mxu0 0
      %1394 = vmatprep.subr.bf16.mxu0 0
      %1395 = vmatpush1.bf16.msra.mxu0 0
      %1396 = vmatprep.mubr.bf16.mxu0 0
      %1397 = vmatmul.mubr.bf16.gmra.mrb[0].mxu0 %v1239
      %v1398 = vpop.f32.mrb[0].mxu0
      %v1399 = vadd.f32 %v1111, %v1398
      %v1400 = vpop.f32.mrb[0].mxu0
      %v1401 = vadd.f32 %v1113, %v1400
      %v1402 = vpop.f32.mrb[0].mxu0
      %v1403 = vpop.f32.mrb[0].mxu0
      %1404 = vdwg.mxu0
      %v1405 = vld [vmem:[%s5] sm:$0xff]
      %v1407 = vlaneseq
      %v1408 = vshrl.u32 %v1407, 7
      %v1409 = vsub.s32 0, %v1408
      %v1410 = vrot.slane %v1405, %v1409
      %v1411 = vlaneseq
      %v1412 = vshrl.u32 %v1411, 7
      %v1413 = vsub.s32 1, %v1412
      %v1414 = vrot.slane %v1405, %v1413
      %v1415 = vlaneseq
      %v1416 = vshrl.u32 %v1415, 7
      %v1417 = vsub.s32 2, %v1416
      %v1418 = vrot.slane %v1405, %v1417
      %v1419 = vlaneseq
      %v1420 = vshrl.u32 %v1419, 7
      %v1421 = vsub.s32 3, %v1420
      %v1422 = vrot.slane %v1405, %v1421
      %v1423 = vlaneseq
      %v1424 = vshrl.u32 %v1423, 7
      %v1425 = vsub.s32 4, %v1424
      %v1426 = vrot.slane %v1405, %v1425
      %v1427 = vlaneseq
      %v1428 = vshrl.u32 %v1427, 7
      %v1429 = vsub.s32 5, %v1428
      %v1430 = vrot.slane %v1405, %v1429
      %v1431 = vlaneseq
      %v1432 = vshrl.u32 %v1431, 7
      %v1433 = vsub.s32 6, %v1432
      %v1434 = vrot.slane %v1405, %v1433
      %v1435 = vlaneseq
      %v1436 = vshrl.u32 %v1435, 7
      %v1437 = vsub.s32 7, %v1436
      %v1438 = vrot.slane %v1405, %v1437
      %v1447 = vadd.f32 %v1276, %v1410
      %v1448 = vadd.f32 %v1278, %v1414
      %v1449 = vadd.f32 %v1317, %v1418
      %v1450 = vadd.f32 %v1319, %v1422
      %v1451 = vadd.f32 %v1358, %v1426
      %v1452 = vadd.f32 %v1360, %v1430
      %v1453 = vadd.f32 %v1399, %v1434
      %v1454 = vadd.f32 %v1401, %v1438
      %v1455 = vpack.c.bf16 %v1447, %v1447
      %v1456 = vpack.c.bf16 %v1448, %v1448
      %v1457 = vpack.c.bf16 %v1449, %v1449
      %v1458 = vpack.c.bf16 %v1450, %v1450
      %v1459 = vpack.c.bf16 %v1451, %v1451
      %v1460 = vpack.c.bf16 %v1452, %v1452
      %v1461 = vpack.c.bf16 %v1453, %v1453
      %v1462 = vpack.c.bf16 %v1454, %v1454
      %v1463 = vmul.bf16 %v1455, 1056980736
      %v1464 = vmul.bf16 %v1456, 1056980736
      %v1465 = vtanh.bf16.pop %v1463
      %v1466 = vtanh.bf16.pop %v1464
      %v1467 = vmul.bf16 %v1465, 1056980736
      %v1468 = vmul.bf16 %v1466, 1056980736
      %v1469 = vadd.bf16 %v1467, 1056980736
      %v1470 = vadd.bf16 %v1468, 1056980736
      %v1471 = vunpack.c.l.bf16 %v1469
      %v1472 = vunpack.c.l.bf16 %v1470
      %v1473 = vmul.bf16 %v1457, 1056980736
      %v1474 = vmul.bf16 %v1458, 1056980736
      %v1475 = vtanh.bf16.pop %v1473
      %v1476 = vtanh.bf16.pop %v1474
      %v1477 = vmul.bf16 %v1475, 1056980736
      %v1478 = vmul.bf16 %v1476, 1056980736
      %v1479 = vadd.bf16 %v1477, 1056980736
      %v1480 = vadd.bf16 %v1478, 1056980736
      %v1481 = vunpack.c.l.bf16 %v1479
      %v1482 = vunpack.c.l.bf16 %v1480
      %v1483 = vtanh.bf16.pop %v1459
      %v1484 = vtanh.bf16.pop %v1460
      %v1485 = vunpack.c.l.bf16 %v1483
      %v1486 = vunpack.c.l.bf16 %v1484
      %v1487 = vmul.bf16 %v1461, 1056980736
      %v1488 = vmul.bf16 %v1462, 1056980736
      %v1489 = vtanh.bf16.pop %v1487
      %v1490 = vtanh.bf16.pop %v1488
      %v1491 = vmul.bf16 %v1489, 1056980736
      %v1492 = vmul.bf16 %v1490, 1056980736
      %v1493 = vadd.bf16 %v1491, 1056980736
      %v1494 = vadd.bf16 %v1492, 1056980736
      %v1495 = vunpack.c.l.bf16 %v1493
      %v1496 = vunpack.c.l.bf16 %v1494
      %v1497 = vmul.f32 %v1481, %v157
      %v1498 = vmul.f32 %v1482, %v158
      %v1499 = vmul.f32 %v1471, %v1485
      %v1500 = vmul.f32 %v1472, %v1486
      %v1501 = vadd.f32 %v1497, %v1499
      %v1502 = vadd.f32 %v1498, %v1500
      %v1503 = vpack.c.bf16 %v1501, %v1501
      %v1504 = vpack.c.bf16 %v1502, %v1502
      %v1505 = vtanh.bf16.pop %v1503
      %v1506 = vtanh.bf16.pop %v1504
      %v1507 = vunpack.c.l.bf16 %v1505
      %v1508 = vunpack.c.l.bf16 %v1506
      %v1509 = vmul.f32 %v1495, %v1507
      %v1510 = vmul.f32 %v1496, %v1508
      %1511 = vst [vmem:[#allocation2] sm:$0xff] %v1509
      %1512 = vst [vmem:[#allocation2 + $0x8] sm:$0xff] %v1510
      %1513 = vst [vmem:[#allocation3] sm:$0xff] %v1501
      %1514 = vst [vmem:[#allocation3 + $0x8] sm:$0xff] %v1502
      %v1515 = vpack.c.bf16 %v1509, %v1509
      %v1516 = vpack.c.bf16 %v1510, %v1510
      %v1517 = vld [vmem:[#allocation13] sm:$0xf]
      %v1518 = vld [vmem:[#allocation13 + $0x4] sm:$0xf]
      %v1519 = vld [vmem:[#allocation13 + $0x8] sm:$0xf]
      %v1520 = vld [vmem:[#allocation13 + $0xc] sm:$0xf]
      %v1521 = vld [vmem:[#allocation13 + $0x10] sm:$0xf]
      %v1522 = vld [vmem:[#allocation13 + $0x14] sm:$0xf]
      %v1523 = vld [vmem:[#allocation13 + $0x18] sm:$0xf]
      %v1524 = vld [vmem:[#allocation13 + $0x1c] sm:$0xf]
      %v1525 = vld [vmem:[#allocation13 + $0x20] sm:$0xf]
      %v1526 = vld [vmem:[#allocation13 + $0x24] sm:$0xf]
      %v1527 = vld [vmem:[#allocation13 + $0x28] sm:$0xf]
      %v1528 = vld [vmem:[#allocation13 + $0x2c] sm:$0xf]
      %v1529 = vld [vmem:[#allocation13 + $0x30] sm:$0xf]
      %v1530 = vld [vmem:[#allocation13 + $0x34] sm:$0xf]
      %v1531 = vld [vmem:[#allocation13 + $0x38] sm:$0xf]
      %v1532 = vld [vmem:[#allocation13 + $0x3c] sm:$0xf]
      %v1533 = vld [vmem:[#allocation13 + $0x40] sm:$0xf]
      %v1534 = vld [vmem:[#allocation13 + $0x44] sm:$0xf]
      %v1535 = vld [vmem:[#allocation13 + $0x48] sm:$0xf]
      %v1536 = vld [vmem:[#allocation13 + $0x4c] sm:$0xf]
      %v1537 = vld [vmem:[#allocation13 + $0x50] sm:$0xf]
      %v1538 = vld [vmem:[#allocation13 + $0x54] sm:$0xf]
      %v1539 = vld [vmem:[#allocation13 + $0x58] sm:$0xf]
      %v1540 = vld [vmem:[#allocation13 + $0x5c] sm:$0xf]
      %v1541 = vld [vmem:[#allocation13 + $0x60] sm:$0xf]
      %v1542 = vld [vmem:[#allocation13 + $0x64] sm:$0xf]
      %v1543 = vld [vmem:[#allocation13 + $0x68] sm:$0xf]
      %v1544 = vld [vmem:[#allocation13 + $0x6c] sm:$0xf]
      %v1545 = vld [vmem:[#allocation13 + $0x70] sm:$0xf]
      %v1546 = vld [vmem:[#allocation13 + $0x74] sm:$0xf]
      %v1547 = vld [vmem:[#allocation13 + $0x78] sm:$0xf]
      %v1548 = vld [vmem:[#allocation13 + $0x7c] sm:$0xf]
      %v1549 = vld [vmem:[%s7] sm:$0x1]
      %v1551 = vlaneseq
      %v1552 = vshrl.u32 %v1551, 7
      %v1553 = vsub.s32 0, %v1552
      %v1554 = vrot.slane %v1549, %v1553
      %v1588 = vunpack.c.l.b16 %v1517
      %v1589 = vunpack.c.l.b16 %v1518
      %v1590 = vunpack.c.l.b16 %v1519
      %v1591 = vunpack.c.l.b16 %v1520
      %v1592 = vunpack.c.l.b16 %v1521
      %v1593 = vunpack.c.l.b16 %v1522
      %v1594 = vunpack.c.l.b16 %v1523
      %v1595 = vunpack.c.l.b16 %v1524
      %v1596 = vunpack.c.l.b16 %v1525
      %v1597 = vunpack.c.l.b16 %v1526
      %v1598 = vunpack.c.l.b16 %v1527
      %v1599 = vunpack.c.l.b16 %v1528
      %v1600 = vunpack.c.l.b16 %v1529
      %v1601 = vunpack.c.l.b16 %v1530
      %v1602 = vunpack.c.l.b16 %v1531
      %v1603 = vunpack.c.l.b16 %v1532
      %v1604 = vunpack.c.l.b16 %v1533
      %v1605 = vunpack.c.l.b16 %v1534
      %v1606 = vunpack.c.l.b16 %v1535
      %v1607 = vunpack.c.l.b16 %v1536
      %v1608 = vunpack.c.l.b16 %v1537
      %v1609 = vunpack.c.l.b16 %v1538
      %v1610 = vunpack.c.l.b16 %v1539
      %v1611 = vunpack.c.l.b16 %v1540
      %v1612 = vunpack.c.l.b16 %v1541
      %v1613 = vunpack.c.l.b16 %v1542
      %v1614 = vunpack.c.l.b16 %v1543
      %v1615 = vunpack.c.l.b16 %v1544
      %v1616 = vunpack.c.l.b16 %v1545
      %v1617 = vunpack.c.l.b16 %v1546
      %v1618 = vunpack.c.l.b16 %v1547
      %v1619 = vunpack.c.l.b16 %v1548
      %v1620 = vpack.c.b16 %v1589, %v1588
      %v1621 = vpack.c.b16 %v1591, %v1590
      %v1622 = vpack.c.b16 %v1593, %v1592
      %v1623 = vpack.c.b16 %v1595, %v1594
      %v1624 = vpack.c.b16 %v1597, %v1596
      %v1625 = vpack.c.b16 %v1599, %v1598
      %v1626 = vpack.c.b16 %v1601, %v1600
      %v1627 = vpack.c.b16 %v1603, %v1602
      %v1628 = vpack.c.b16 %v1605, %v1604
      %v1629 = vpack.c.b16 %v1607, %v1606
      %v1630 = vpack.c.b16 %v1609, %v1608
      %v1631 = vpack.c.b16 %v1611, %v1610
      %v1632 = vpack.c.b16 %v1613, %v1612
      %v1633 = vpack.c.b16 %v1615, %v1614
      %v1634 = vpack.c.b16 %v1617, %v1616
      %v1635 = vpack.c.b16 %v1619, %v1618
      %1652 = vmatprep.subr.bf16.mxu0 0
      %1653 = vmatpush1.bf16.msra.mxu0 %v1620
      %1654 = vmatprep.subr.bf16.mxu0 0
      %1655 = vmatpush1.bf16.msra.mxu0 %v1621
      %1656 = vmatprep.subr.bf16.mxu0 0
      %1657 = vmatpush1.bf16.msra.mxu0 %v1622
      %1658 = vmatprep.subr.bf16.mxu0 0
      %1659 = vmatpush1.bf16.msra.mxu0 %v1623
      %1660 = vmatprep.subr.bf16.mxu0 0
      %1661 = vmatpush1.bf16.msra.mxu0 %v1624
      %1662 = vmatprep.subr.bf16.mxu0 0
      %1663 = vmatpush1.bf16.msra.mxu0 %v1625
      %1664 = vmatprep.subr.bf16.mxu0 0
      %1665 = vmatpush1.bf16.msra.mxu0 %v1626
      %1666 = vmatprep.subr.bf16.mxu0 0
      %1667 = vmatpush1.bf16.msra.mxu0 %v1627
      %1668 = vmatprep.subr.bf16.mxu0 0
      %1669 = vmatpush1.bf16.msra.mxu0 %v1628
      %1670 = vmatprep.subr.bf16.mxu0 0
      %1671 = vmatpush1.bf16.msra.mxu0 %v1629
      %1672 = vmatprep.subr.bf16.mxu0 0
      %1673 = vmatpush1.bf16.msra.mxu0 %v1630
      %1674 = vmatprep.subr.bf16.mxu0 0
      %1675 = vmatpush1.bf16.msra.mxu0 %v1631
      %1676 = vmatprep.subr.bf16.mxu0 0
      %1677 = vmatpush1.bf16.msra.mxu0 %v1632
      %1678 = vmatprep.subr.bf16.mxu0 0
      %1679 = vmatpush1.bf16.msra.mxu0 %v1633
      %1680 = vmatprep.subr.bf16.mxu0 0
      %1681 = vmatpush1.bf16.msra.mxu0 %v1634
      %1682 = vmatprep.subr.bf16.mxu0 0
      %1683 = vmatpush1.bf16.msra.mxu0 %v1635
      %1684 = vmatprep.mubr.bf16.mxu0 %v1516
      %1685 = vmatmul.mubr.bf16.gmra.mrb[0].mxu0 %v1515
      %v1686 = vpop.f32.mrb[0].mxu0
      %v1687 = vadd.f32 %v1554, %v1686
      %v1688 = vpop.f32.mrb[0].mxu0
      %v1689 = vpop.f32.mrb[0].mxu0
      %v1690 = vpop.f32.mrb[0].mxu0
      %1691 = vdwg.mxu0
      %vm1692 = vcmp.gt.f32.partialorder %v1687, 0.0
      %v1693 = vmin.f32 %v1687, 0.0
      %v1694 = vmul.f32 %v1693, 1.442695
      %v1695 = vpow.pop %v1694
      %v1696 = vsub.f32 %v1695, 1.0
      %v1697 = vsel %vm1692, %v1687, %v1696
      %v1698 = vpack.c.bf16 %v1697, %v1697
      %v1699 = vld [vmem:[#allocation15] sm:$0xf]
      %v1700 = vld [vmem:[#allocation15 + $0x4] sm:$0xf]
      %v1701 = vld [vmem:[#allocation15 + $0x8] sm:$0xf]
      %v1702 = vld [vmem:[#allocation15 + $0xc] sm:$0xf]
      %v1703 = vld [vmem:[#allocation15 + $0x10] sm:$0xf]
      %v1704 = vld [vmem:[#allocation15 + $0x14] sm:$0xf]
      %v1705 = vld [vmem:[#allocation15 + $0x18] sm:$0xf]
      %v1706 = vld [vmem:[#allocation15 + $0x1c] sm:$0xf]
      %v1707 = vld [vmem:[#allocation15 + $0x20] sm:$0xf]
      %v1708 = vld [vmem:[#allocation15 + $0x24] sm:$0xf]
      %v1709 = vld [vmem:[#allocation15 + $0x28] sm:$0xf]
      %v1710 = vld [vmem:[#allocation15 + $0x2c] sm:$0xf]
      %v1711 = vld [vmem:[#allocation15 + $0x30] sm:$0xf]
      %v1712 = vld [vmem:[#allocation15 + $0x34] sm:$0xf]
      %v1713 = vld [vmem:[#allocation15 + $0x38] sm:$0xf]
      %v1714 = vld [vmem:[#allocation15 + $0x3c] sm:$0xf]
      %v1715 = vld [vmem:[%s9] sm:$0x1]
      %v1717 = vlaneseq
      %v1718 = vshrl.u32 %v1717, 7
      %v1719 = vsub.s32 0, %v1718
      %v1720 = vrot.slane %v1715, %v1719
      %v1738 = vunpack.c.l.b16 %v1699
      %v1739 = vunpack.c.l.b16 %v1700
      %v1740 = vunpack.c.l.b16 %v1701
      %v1741 = vunpack.c.l.b16 %v1702
      %v1742 = vunpack.c.l.b16 %v1703
      %v1743 = vunpack.c.l.b16 %v1704
      %v1744 = vunpack.c.l.b16 %v1705
      %v1745 = vunpack.c.l.b16 %v1706
      %v1746 = vunpack.c.l.b16 %v1707
      %v1747 = vunpack.c.l.b16 %v1708
      %v1748 = vunpack.c.l.b16 %v1709
      %v1749 = vunpack.c.l.b16 %v1710
      %v1750 = vunpack.c.l.b16 %v1711
      %v1751 = vunpack.c.l.b16 %v1712
      %v1752 = vunpack.c.l.b16 %v1713
      %v1753 = vunpack.c.l.b16 %v1714
      %v1754 = vpack.c.b16 %v1739, %v1738
      %v1755 = vpack.c.b16 %v1741, %v1740
      %v1756 = vpack.c.b16 %v1743, %v1742
      %v1757 = vpack.c.b16 %v1745, %v1744
      %v1758 = vpack.c.b16 %v1747, %v1746
      %v1759 = vpack.c.b16 %v1749, %v1748
      %v1760 = vpack.c.b16 %v1751, %v1750
      %v1761 = vpack.c.b16 %v1753, %v1752
      %1770 = vmatprep.subr.bf16.mxu0 0
      %1771 = vmatpush1.bf16.msra.mxu0 %v1754
      %1772 = vmatprep.subr.bf16.mxu0 0
      %1773 = vmatpush1.bf16.msra.mxu0 %v1755
      %1774 = vmatprep.subr.bf16.mxu0 0
      %1775 = vmatpush1.bf16.msra.mxu0 %v1756
      %1776 = vmatprep.subr.bf16.mxu0 0
      %1777 = vmatpush1.bf16.msra.mxu0 %v1757
      %1778 = vmatprep.subr.bf16.mxu0 0
      %1779 = vmatpush1.bf16.msra.mxu0 %v1758
      %1780 = vmatprep.subr.bf16.mxu0 0
      %1781 = vmatpush1.bf16.msra.mxu0 %v1759
      %1782 = vmatprep.subr.bf16.mxu0 0
      %1783 = vmatpush1.bf16.msra.mxu0 %v1760
      %1784 = vmatprep.subr.bf16.mxu0 0
      %1785 = vmatpush1.bf16.msra.mxu0 %v1761
      %1786 = vmatprep.subr.bf16.mxu0 0
      %1787 = vmatpush1.bf16.msra.mxu0 0
      %1788 = vmatprep.subr.bf16.mxu0 0
      %1789 = vmatpush1.bf16.msra.mxu0 0
      %1790 = vmatprep.subr.bf16.mxu0 0
      %1791 = vmatpush1.bf16.msra.mxu0 0
      %1792 = vmatprep.subr.bf16.mxu0 0
      %1793 = vmatpush1.bf16.msra.mxu0 0
      %1794 = vmatprep.subr.bf16.mxu0 0
      %1795 = vmatpush1.bf16.msra.mxu0 0
      %1796 = vmatprep.subr.bf16.mxu0 0
      %1797 = vmatpush1.bf16.msra.mxu0 0
      %1798 = vmatprep.subr.bf16.mxu0 0
      %1799 = vmatpush1.bf16.msra.mxu0 0
      %1800 = vmatprep.subr.bf16.mxu0 0
      %1801 = vmatpush1.bf16.msra.mxu0 0
      %1802 = vmatprep.mubr.bf16.mxu0 0
      %1803 = vmatmul.mubr.bf16.gmra.mrb[0].mxu0 %v1698
      %v1804 = vpop.f32.mrb[0].mxu0
      %v1805 = vadd.f32 %v1720, %v1804
      %v1806 = vpop.f32.mrb[0].mxu0
      %v1807 = vpop.f32.mrb[0].mxu0
      %v1808 = vpop.f32.mrb[0].mxu0
      %1809 = vdwg.mxu0
      %v1810 = vpack.c.bf16 %v1805, %v1805
      %s1811 = smul.addr %s146, 4
      %s1812 = scalar_lea.vmem [#allocation16], %s1811
      %1813 = vst [vmem:[%s1812] sm:$0xf] %v1810
    $region78: #{tpu_custom_call.1} parent=1 // loop_footer
      %s150 = sadd.s32 1, %s146
    $region79: #{tpu_custom_call.1} parent=1 // loop_footer_branch
      %145 = sbr.rel target = $region75
    $region80: #{tpu_custom_call.1} parent=1 // loop_exit
      _
    // Predicated region
    $region81: #{tpu_custom_call.1} parent=1 // pred_check
      %p1814 = pneg %p133
    $region82: #{tpu_custom_call.1} parent=1 // pred_check_branch
      %1816 = sbr.rel (%p1814) target = $region84
    $region83: #{tpu_custom_call.1} parent=1 // pred_region
      %v1817 = vld [vmem:[#allocation2] sm:$0xff]
      %v1818 = vld [vmem:[#allocation2 + $0x8] sm:$0xff]
      %1819 = vst [vmem:[#allocation17] sm:$0xff] %v1817
      %1820 = vst [vmem:[#allocation17 + $0x8] sm:$0xff] %v1818
      %v1821 = vld [vmem:[#allocation3] sm:$0xff]
      %v1822 = vld [vmem:[#allocation3 + $0x8] sm:$0xff]
      %1823 = vst [vmem:[#allocation19] sm:$0xff] %v1821
      %1824 = vst [vmem:[#allocation19 + $0x8] sm:$0xff] %v1822
    $region84: #{tpu_custom_call.1} parent=1 // pred_fallthru
      _
    // Predicated region
    $region85: #{tpu_custom_call.1} parent=1 // pred_check
      _
    $region86: #{tpu_custom_call.1} parent=1 // pred_check_branch
      %1826 = sbr.rel (0) target = $region88
    $region87: #{tpu_custom_call.1} parent=1 // pred_region
      %s1828 = ssub.s32 512, 512
      %1829 = vsyncadd [#allocation6], %s1828
      %s1830 = sshll.u32 [#allocation16], 4
      %s1831 = int_to_ptr.vmem [resolvable:$true] %s1830
      %1836 = dma.vmem_to_hbm [thread:$0]  %s1831, 512, %s10, [#allocation6], 64, 64, 4
    $region88: #{tpu_custom_call.1} parent=1 // pred_fallthru
      _
    // Predicated region
    $region89: #{tpu_custom_call.1} parent=1 // pred_check
      _
    $region90: #{tpu_custom_call.1} parent=1 // pred_check_branch
      %1838 = sbr.rel (0) target = $region92
    $region91: #{tpu_custom_call.1} parent=1 // pred_region
      %s1840 = ssub.s32 256, 256
      %1841 = vsyncadd [#allocation18], %s1840
      %s1843 = sshll.u32 [#allocation17], 4
      %s1844 = int_to_ptr.vmem [resolvable:$true] %s1843
      %1846 = dma.vmem_to_hbm [thread:$0]  %s1844, 256, %s11, [#allocation18]
    $region92: #{tpu_custom_call.1} parent=1 // pred_fallthru
      _
    // Predicated region
    $region93: #{tpu_custom_call.1} parent=1 // pred_check
      _
    $region94: #{tpu_custom_call.1} parent=1 // pred_check_branch
      %1848 = sbr.rel (0) target = $region96
    $region95: #{tpu_custom_call.1} parent=1 // pred_region
      %s1850 = ssub.s32 256, 256
      %1851 = vsyncadd [#allocation18], %s1850
      %s1853 = sshll.u32 [#allocation19], 4
      %s1854 = int_to_ptr.vmem [resolvable:$true] %s1853
      %1856 = dma.vmem_to_hbm [thread:$0]  %s1854, 256, %s12, [#allocation18]
    $region96: #{tpu_custom_call.1} parent=1 // pred_fallthru
      _
    // Predicated region
    $region97: #{tpu_custom_call.1} parent=1 // pred_check
      _
    $region98: #{tpu_custom_call.1} parent=1 // pred_check_branch
      %1858 = sbr.rel (0) target = $region100
    $region99: #{tpu_custom_call.1} parent=1 // pred_region
      %1859 = dma.done [#allocation6], 512
    $region100: #{tpu_custom_call.1} parent=1 // pred_fallthru
      _
    // Predicated region
    $region101: #{tpu_custom_call.1} parent=1 // pred_check
      _
    $region102: #{tpu_custom_call.1} parent=1 // pred_check_branch
      %1861 = sbr.rel (0) target = $region104
    $region103: #{tpu_custom_call.1} parent=1 // pred_region
      %1862 = dma.done [#allocation18], 256
    $region104: #{tpu_custom_call.1} parent=1 // pred_fallthru
      _
    // Predicated region
    $region105: #{tpu_custom_call.1} parent=1 // pred_check
      _
    $region106: #{tpu_custom_call.1} parent=1 // pred_check_branch
      %1864 = sbr.rel (0) target = $region108
    $region107: #{tpu_custom_call.1} parent=1 // pred_region
      %1865 = dma.done [#allocation18], 256
    $region108: #{tpu_custom_call.1} parent=1 // pred_fallthru
      _
    %1866 = vsyncpa [#allocation5], 1
    %1867 = vsyncpa [#allocation8], 1
    %1868 = vsyncpa [#allocation11], 1
    %1869 = vsyncpa [#allocation14], 1
    %1870 = vsyncpa [#allocation6], 1
    %1871 = vsyncpa [#allocation18], 1

</llo_original>
